<compile_context>
chip_gen: v5e
topology: v5e:2x2
jax: 0.10.0
libtpu: 0.0.40
codegen_flags: <defaults>
</compile_context>

<pallas_src>
import math

import jax
import jax.numpy as jnp
from jax.experimental import pallas as pl
from jax.experimental.pallas import tpu as pltpu

D_MODEL = 32
D_STATE = 2
D_CONV = 4
DT_RANK = math.ceil(D_MODEL / 16)   # the module's dt_rank='auto' rule
EPS = 1e-5


def _sigmoid(z):
    # numerically-stable logistic using only exp / where / div
    e = jnp.exp(-jnp.abs(z))
    return jnp.where(z >= 0, 1.0 / (1.0 + e), e / (1.0 + e))


def _softplus(z):
    # numerically-stable softplus: max(z, 0) + log(1 + exp(-|z|))
    return jnp.maximum(z, 0.0) + jnp.log(1.0 + jnp.exp(-jnp.abs(z)))


def residual_block_pallas(x, params):
    """Pallas TPU forward of the PyTorch ResidualBlock.

    x: (L, B, D) seq-major, exactly as the PyTorch ResidualBlock receives it.
    Returns the (B, L, D) module output.  Like the module's final `x2 + x1`
    ((B,L,D) + (L,B,D) add), this requires B == L.
    """
    L, B, D = x.shape
    assert B == L, "the module's (B,L,D)+(L,B,D) residual add requires B == L"
    R = params["w_dt"].shape[0]
    N = params["a_log"].shape[1]
    K = params["w_conv"].shape[0]
    LB = L * B

    # ---- constant-parameter / layout glue (done once, outside the kernel) ----
    x_sm = x.reshape(LB, D)                                   # seq-major tokens (l, b)
    x_bm = jnp.transpose(x, (1, 0, 2)).reshape(LB, D)         # batch-major tokens (b, l)
    w_in_x = params["w_in"][:, :D]                            # split fused in_proj
    w_in_r = params["w_in"][:, D:]
    w_delta = params["w_x"][:, :R]                            # split fused x_proj
    w_b = params["w_x"][:, R:R + N]
    w_c = params["w_x"][:, R + N:R + 2 * N]
    a_nd = (-jnp.exp(params["a_log"])).T                      # A = -exp(A_log), (N, D)

    def kernel(x_sm_ref, x_bm_ref, rms_w_ref,
               w_in_x_ref, w_in_r_ref, w_conv_ref, b_conv_ref,
               w_delta_ref, w_b_ref, w_c_ref, w_dt_ref, b_dt_ref,
               a_ref, d_ref, w_out_ref,
               out_ref, y_scr):
        # ---- RMSNorm of the (seq-major) pipeline input ----
        xv = x_sm_ref[...]                                    # (L*B, D)
        ms = jnp.mean(xv * xv, axis=-1, keepdims=True)
        x1 = xv * jax.lax.rsqrt(ms + EPS) * rms_w_ref[...]

        # ---- in_proj: two batched MXU matmuls over all L*B tokens ----
        xm = jnp.dot(x1, w_in_x_ref[...], preferred_element_type=jnp.float32)
        res = jnp.dot(x1, w_in_r_ref[...], preferred_element_type=jnp.float32)

        # ---- depthwise causal conv1d along the sequence ----
        # Rows are seq-major (row = l*B + b), so a shift of s time steps is a shift
        # of s*B whole (sublane-aligned) rows: one small zero-padded copy + K static
        # slices, once per call (not per batch / per grid step).
        xm_pad = jnp.concatenate(
            [jnp.zeros(((K - 1) * B, D), jnp.float32), xm], axis=0)
        conv = b_conv_ref[...] + xm * w_conv_ref[K - 1]
        for k in range(K - 1):
            conv = conv + xm_pad[k * B:k * B + LB, :] * w_conv_ref[k]
        xs = conv * _sigmoid(conv)                            # SiLU, (L*B, D)

        # ---- SSM projections (split weights, batched over all tokens) ----
        delta_r = jnp.dot(xs, w_delta_ref[...], preferred_element_type=jnp.float32)
        bm = jnp.dot(xs, w_b_ref[...], preferred_element_type=jnp.float32)    # (L*B, N)
        cm = jnp.dot(xs, w_c_ref[...], preferred_element_type=jnp.float32)    # (L*B, N)
        delta = _softplus(
            jnp.dot(delta_r, w_dt_ref[...], preferred_element_type=jnp.float32)
            + b_dt_ref[...])                                                  # (L*B, D)

        # ---- selective scan ----
        # Everything input-dependent is precomputed vectorized; the only sequential
        # work is the length-L recurrence.  Per-step y rows go straight into a VMEM
        # scratch (no list / concatenate of states).
        u_skip = xs * d_ref[...]                              # u * D skip term
        da = [jnp.exp(delta * a_ref[n]) for n in range(N)]    # N x (L*B, D)
        db = [delta * bm[:, n:n + 1] for n in range(N)]       # N x (L*B, D)
        state = [jnp.zeros((B, D), jnp.float32) for _ in range(N)]
        for l in range(L):                                    # sequential recurrence
            lo = l * B
            y_l = u_skip[lo:lo + B, :]
            for n in range(N):
                state[n] = da[n][lo:lo + B, :] * state[n] + db[n][lo:lo + B, :]
                y_l = y_l + state[n] * cm[lo:lo + B, n:n + 1]
            y_scr[pl.ds(lo, B), :] = y_l

        # ---- gate with SiLU(res) and out_proj (one batched matmul) ----
        y = y_scr[...] * (res * _sigmoid(res))
        out = jnp.dot(y, w_out_ref[...], preferred_element_type=jnp.float32)

        # ---- residual add, faithful to the module's x2 + x1 with x2:(B,L,D),
        # x1:(L,B,D), B == L.  Row (l, b) of `out` holds x2[b, l]; adding the
        # RMSNorm of the batch-major input gives x2[b, l] + x1[b, l]; the wrapper
        # only applies a pure transpose to recover the module's output layout.
        xr = x_bm_ref[...]
        ms_r = jnp.mean(xr * xr, axis=-1, keepdims=True)
        x1_r = xr * jax.lax.rsqrt(ms_r + EPS) * rms_w_ref[...]
        out_ref[...] = (out + x1_r).astype(out_ref.dtype)

    def full(shape):
        return pl.BlockSpec(shape, lambda i, _s=shape: (0,) * len(_s))

    z = pl.pallas_call(
        kernel,
        out_shape=jax.ShapeDtypeStruct((LB, D), jnp.float32),
        grid=(1,),                       # whole problem in one step: amortizes the
                                         # per-step grid overhead and lets every
                                         # projection be one batched MXU matmul
        in_specs=[
            full((LB, D)),               # x, seq-major tokens
            full((LB, D)),               # x, batch-major tokens (residual term)
            full((1, D)),                # RMSNorm weight
            full((D, D)),                # in_proj -> x
            full((D, D)),                # in_proj -> res
            full((K, D)),                # depthwise conv weight (tap-major)
            full((1, D)),                # conv bias
            full((D, R)),                # x_proj -> delta
            full((D, N)),                # x_proj -> B
            full((D, N)),                # x_proj -> C
            full((R, D)),                # dt_proj weight
            full((1, D)),                # dt_proj bias
            full((N, D)),                # A = -exp(A_log)
            full((1, D)),                # D (skip connection)
            full((D, D)),                # out_proj weight
        ],
        out_specs=full((LB, D)),
        scratch_shapes=[pltpu.VMEM((LB, D), jnp.float32)],
        compiler_params=pltpu.CompilerParams(
            dimension_semantics=("arbitrary",)),
    )(x_sm, x_bm,
      params["rms_w"].reshape(1, D),
      w_in_x, w_in_r,
      params["w_conv"], params["b_conv"].reshape(1, D),
      w_delta, w_b, w_c,
      params["w_dt"], params["b_dt"].reshape(1, D),
      a_nd, params["D"].reshape(1, D),
      params["w_out"])

    # kernel row (l, b) holds final[b, l]; transpose back to the module's layout.
    return jnp.transpose(z.reshape(L, B, D), (1, 0, 2))


def residual_block_ref(x, params):
    """Pure-JAX reference mirroring the PyTorch module exactly."""
    L, B, D = x.shape
    R = params["w_dt"].shape[0]
    N = params["a_log"].shape[1]
    K = params["w_conv"].shape[0]

    ms = jnp.mean(x * x, axis=-1, keepdims=True)
    x1 = x * jax.lax.rsqrt(ms + EPS) * params["rms_w"]        # (L, B, D) = norm(x)
    xt = jnp.transpose(x1, (1, 0, 2))                         # (B, L, D)
    xr = xt @ params["w_in"]
    xm, res = xr[..., :D], xr[..., D:]
    xm_pad = jnp.pad(xm, ((0, 0), (K - 1, 0), (0, 0)))
    conv = sum(xm_pad[:, k:k + L, :] * params["w_conv"][k] for k in range(K))
    conv = conv + params["b_conv"]
    xs = conv * _sigmoid(conv)
    x_dbl = xs @ params["w_x"]
    delta_r, Bm, Cm = x_dbl[..., :R], x_dbl[..., R:R + N], x_dbl[..., R + N:]
    delta = _softplus(delta_r @ params["w_dt"] + params["b_dt"])
    A = -jnp.exp(params["a_log"])                             # (D, N)
    dA = jnp.exp(delta[..., None] * A)                        # (B, L, D, N)
    dB = delta[..., None] * Bm[:, :, None, :]                 # (B, L, D, N)

    def step(s, inp):
        dA_i, dB_i, C_i = inp
        s = dA_i * s + dB_i
        return s, jnp.einsum('bdn,bn->bd', s, C_i)

    s0 = jnp.zeros((B, D, N), jnp.float32)
    _, ys = jax.lax.scan(step, s0,
                         (jnp.swapaxes(dA, 0, 1), jnp.swapaxes(dB, 0, 1),
                          jnp.swapaxes(Cm, 0, 1)))
    y = jnp.swapaxes(ys, 0, 1)                                # (B, L, D)
    y = y + xs * params["D"]
    y = y * (res * _sigmoid(res))
    out = y @ params["w_out"]
    return out + x1                                           # (B,L,D) + (L,B,D), B == L


if __name__ == "__main__":
    SEQ = 8
    BATCH = 8   # must equal SEQ for the module's (B,L,D)+(L,B,D) residual add
    D, R, N, K = D_MODEL, DT_RANK, D_STATE, D_CONV

    key = jax.random.PRNGKey(0)
    keys = jax.random.split(key, 10)
    params = {
        "rms_w": 1.0 + 0.1 * jax.random.normal(keys[0], (D,), jnp.float32),
        "w_in": 0.1 * jax.random.normal(keys[1], (D, 2 * D), jnp.float32),
        "w_conv": 0.2 * jax.random.normal(keys[2], (K, D), jnp.float32),
        "b_conv": 0.05 * jax.random.normal(keys[3], (D,), jnp.float32),
        "w_x": 0.1 * jax.random.normal(keys[4], (D, R + 2 * N), jnp.float32),
        "w_dt": 0.3 * jax.random.normal(keys[5], (R, D), jnp.float32),
        "b_dt": 0.05 * jax.random.normal(keys[6], (D,), jnp.float32),
        # A_log = log(repeat(arange(1, d_state+1), 'n -> d n')), as in the module
        "a_log": jnp.log(jnp.tile(jnp.arange(1, N + 1, dtype=jnp.float32)[None, :],
                                  (D, 1))),
        "D": 1.0 + 0.1 * jax.random.normal(keys[7], (D,), jnp.float32),
        "w_out": 0.1 * jax.random.normal(keys[8], (D, D), jnp.float32),
    }
    x = jax.random.normal(keys[9], (SEQ, BATCH, D), jnp.float32)

    out = residual_block_pallas(x, params)
    out = jax.block_until_ready(out)

    ref = residual_block_ref(x, params)
    assert out.shape == (BATCH, SEQ, D)
    # Tolerance allows for MXU bf16-pass rounding differences between the in-kernel
    # dots and the XLA reference matmuls; any structural/layout bug is O(1).
    assert jnp.allclose(out, ref, atol=2e-2, rtol=2e-2), \
        float(jnp.max(jnp.abs(out - ref)))
    print("KERNEL_OK")
</pallas_src>

<mosaic_0001>
module attributes {stable_mosaic.version = 11 : i64} {
  func.func @kernel(%arg0: i32, %arg1: memref<64x32xf32, #tpu.memory_space<vmem>>, %arg2: memref<64x32xf32, #tpu.memory_space<vmem>>, %arg3: memref<1x32xf32, #tpu.memory_space<vmem>>, %arg4: memref<32x32xf32, #tpu.memory_space<vmem>>, %arg5: memref<32x32xf32, #tpu.memory_space<vmem>>, %arg6: memref<4x32xf32, #tpu.memory_space<vmem>>, %arg7: memref<1x32xf32, #tpu.memory_space<vmem>>, %arg8: memref<32x2xf32, #tpu.memory_space<vmem>>, %arg9: memref<32x2xf32, #tpu.memory_space<vmem>>, %arg10: memref<32x2xf32, #tpu.memory_space<vmem>>, %arg11: memref<2x32xf32, #tpu.memory_space<vmem>>, %arg12: memref<1x32xf32, #tpu.memory_space<vmem>>, %arg13: memref<2x32xf32, #tpu.memory_space<vmem>>, %arg14: memref<1x32xf32, #tpu.memory_space<vmem>>, %arg15: memref<32x32xf32, #tpu.memory_space<vmem>>, %arg16: memref<64x32xf32, #tpu.memory_space<vmem>>, %arg17: memref<64x32xf32, #tpu.memory_space<vmem>>) attributes {dimension_semantics = [#tpu.dimension_semantics<arbitrary>], iteration_bounds = array<i64: 1>, scalar_prefetch = 0 : i64, scratch_operands = 1 : i64, tpu.core_type = #tpu.core_type<tc>, window_params = [{pipeline_mode = #tpu.pipeline_mode<synchronous>, transform_indices = @transform_0, window_bounds = array<i64: 64, 32>}, {pipeline_mode = #tpu.pipeline_mode<synchronous>, transform_indices = @transform_1, window_bounds = array<i64: 64, 32>}, {pipeline_mode = #tpu.pipeline_mode<synchronous>, transform_indices = @transform_2, window_bounds = array<i64: 1, 32>}, {pipeline_mode = #tpu.pipeline_mode<synchronous>, transform_indices = @transform_3, window_bounds = array<i64: 32, 32>}, {pipeline_mode = #tpu.pipeline_mode<synchronous>, transform_indices = @transform_4, window_bounds = array<i64: 32, 32>}, {pipeline_mode = #tpu.pipeline_mode<synchronous>, transform_indices = @transform_5, window_bounds = array<i64: 4, 32>}, {pipeline_mode = #tpu.pipeline_mode<synchronous>, transform_indices = @transform_6, window_bounds = array<i64: 1, 32>}, {pipeline_mode = #tpu.pipeline_mode<synchronous>, transform_indices = @transform_7, window_bounds = array<i64: 32, 2>}, {pipeline_mode = #tpu.pipeline_mode<synchronous>, transform_indices = @transform_8, window_bounds = array<i64: 32, 2>}, {pipeline_mode = #tpu.pipeline_mode<synchronous>, transform_indices = @transform_9, window_bounds = array<i64: 32, 2>}, {pipeline_mode = #tpu.pipeline_mode<synchronous>, transform_indices = @transform_10, window_bounds = array<i64: 2, 32>}, {pipeline_mode = #tpu.pipeline_mode<synchronous>, transform_indices = @transform_11, window_bounds = array<i64: 1, 32>}, {pipeline_mode = #tpu.pipeline_mode<synchronous>, transform_indices = @transform_12, window_bounds = array<i64: 2, 32>}, {pipeline_mode = #tpu.pipeline_mode<synchronous>, transform_indices = @transform_13, window_bounds = array<i64: 1, 32>}, {pipeline_mode = #tpu.pipeline_mode<synchronous>, transform_indices = @transform_14, window_bounds = array<i64: 32, 32>}, {pipeline_mode = #tpu.pipeline_mode<synchronous>, transform_indices = @transform_15, window_bounds = array<i64: 64, 32>}]} {
    %c0 = arith.constant 0 : index
    %c0_0 = arith.constant 0 : index
    %0 = vector.load %arg1[%c0, %c0_0] : memref<64x32xf32, #tpu.memory_space<vmem>>, vector<64x32xf32>
    %1 = arith.mulf %0, %0 : vector<64x32xf32>
    %cst = arith.constant dense<0.000000e+00> : vector<64xf32>
    %2 = vector.multi_reduction <add>, %1, %cst [1] : vector<64x32xf32> to vector<64xf32>
    %3 = vector.shape_cast %2 : vector<64xf32> to vector<64x1xf32>
    %cst_1 = arith.constant 3.200000e+01 : f32
    %4 = vector.broadcast %cst_1 : f32 to vector<64x1xf32>
    %5 = arith.divf %3, %4 : vector<64x1xf32>
    %cst_2 = arith.constant 9.99999974E-6 : f32
    %6 = vector.broadcast %cst_2 : f32 to vector<64x1xf32>
    %7 = arith.addf %5, %6 : vector<64x1xf32>
    %8 = math.rsqrt %7 : vector<64x1xf32>
    %9 = vector.broadcast %8 : vector<64x1xf32> to vector<64x32xf32>
    %10 = arith.mulf %0, %9 : vector<64x32xf32>
    %c0_3 = arith.constant 0 : index
    %c0_4 = arith.constant 0 : index
    %11 = vector.load %arg3[%c0_3, %c0_4] : memref<1x32xf32, #tpu.memory_space<vmem>>, vector<1x32xf32>
    %12 = vector.broadcast %11 : vector<1x32xf32> to vector<64x32xf32>
    %13 = arith.mulf %10, %12 : vector<64x32xf32>
    %c0_5 = arith.constant 0 : index
    %c0_6 = arith.constant 0 : index
    %14 = vector.load %arg4[%c0_5, %c0_6] : memref<32x32xf32, #tpu.memory_space<vmem>>, vector<32x32xf32>
    %cst_7 = arith.constant dense<0.000000e+00> : vector<64x32xf32>
    %15 = tpu.matmul %13, %14, %cst_7 {dimension_numbers = #tpu.dot_dimension_numbers<[1], [0], [0], [1], [0, 0, 1, 1], [], []>} : vector<64x32xf32>, vector<32x32xf32>, vector<64x32xf32> -> vector<64x32xf32>
    %c0_8 = arith.constant 0 : index
    %c0_9 = arith.constant 0 : index
    %16 = vector.load %arg5[%c0_8, %c0_9] : memref<32x32xf32, #tpu.memory_space<vmem>>, vector<32x32xf32>
    %cst_10 = arith.constant dense<0.000000e+00> : vector<64x32xf32>
    %17 = tpu.matmul %13, %16, %cst_10 {dimension_numbers = #tpu.dot_dimension_numbers<[1], [0], [0], [1], [0, 0, 1, 1], [], []>} : vector<64x32xf32>, vector<32x32xf32>, vector<64x32xf32> -> vector<64x32xf32>
    %cst_11 = arith.constant 0.000000e+00 : f32
    %18 = vector.broadcast %cst_11 : f32 to vector<24x32xf32>
    %19 = tpu.concatenate %18, %15 in 0 : vector<24x32xf32>, vector<64x32xf32> -> vector<88x32xf32>
    %c0_12 = arith.constant 0 : index
    %c0_13 = arith.constant 0 : index
    %20 = vector.load %arg7[%c0_12, %c0_13] : memref<1x32xf32, #tpu.memory_space<vmem>>, vector<1x32xf32>
    %c3 = arith.constant 3 : index
    %c0_14 = arith.constant 0 : index
    %21 = vector.load %arg6[%c3, %c0_14] : memref<4x32xf32, #tpu.memory_space<vmem>>, vector<1x32xf32>
    %22 = vector.shape_cast %21 : vector<1x32xf32> to vector<32xf32>
    %23 = vector.shape_cast %22 : vector<32xf32> to vector<1x32xf32>
    %24 = vector.broadcast %23 : vector<1x32xf32> to vector<64x32xf32>
    %25 = arith.mulf %15, %24 : vector<64x32xf32>
    %26 = vector.broadcast %20 : vector<1x32xf32> to vector<64x32xf32>
    %27 = arith.addf %26, %25 : vector<64x32xf32>
    %28 = vector.extract_strided_slice %19 {offsets = [0, 0], sizes = [64, 32], strides = [1, 1]} : vector<88x32xf32> to vector<64x32xf32>
    %c0_15 = arith.constant 0 : index
    %c0_16 = arith.constant 0 : index
    %29 = vector.load %arg6[%c0_15, %c0_16] : memref<4x32xf32, #tpu.memory_space<vmem>>, vector<1x32xf32>
    %30 = vector.shape_cast %29 : vector<1x32xf32> to vector<32xf32>
    %31 = vector.shape_cast %30 : vector<32xf32> to vector<1x32xf32>
    %32 = vector.broadcast %31 : vector<1x32xf32> to vector<64x32xf32>
    %33 = arith.mulf %28, %32 : vector<64x32xf32>
    %34 = arith.addf %27, %33 : vector<64x32xf32>
    %35 = vector.extract_strided_slice %19 {offsets = [8, 0], sizes = [64, 32], strides = [1, 1]} : vector<88x32xf32> to vector<64x32xf32>
    %c1 = arith.constant 1 : index
    %c0_17 = arith.constant 0 : index
    %36 = vector.load %arg6[%c1, %c0_17] : memref<4x32xf32, #tpu.memory_space<vmem>>, vector<1x32xf32>
    %37 = vector.shape_cast %36 : vector<1x32xf32> to vector<32xf32>
    %38 = vector.shape_cast %37 : vector<32xf32> to vector<1x32xf32>
    %39 = vector.broadcast %38 : vector<1x32xf32> to vector<64x32xf32>
    %40 = arith.mulf %35, %39 : vector<64x32xf32>
    %41 = arith.addf %34, %40 : vector<64x32xf32>
    %42 = vector.extract_strided_slice %19 {offsets = [16, 0], sizes = [64, 32], strides = [1, 1]} : vector<88x32xf32> to vector<64x32xf32>
    %c2 = arith.constant 2 : index
    %c0_18 = arith.constant 0 : index
    %43 = vector.load %arg6[%c2, %c0_18] : memref<4x32xf32, #tpu.memory_space<vmem>>, vector<1x32xf32>
    %44 = vector.shape_cast %43 : vector<1x32xf32> to vector<32xf32>
    %45 = vector.shape_cast %44 : vector<32xf32> to vector<1x32xf32>
    %46 = vector.broadcast %45 : vector<1x32xf32> to vector<64x32xf32>
    %47 = arith.mulf %42, %46 : vector<64x32xf32>
    %48 = arith.addf %41, %47 : vector<64x32xf32>
    %49 = math.absf %48 : vector<64x32xf32>
    %cst_19 = arith.constant 0.000000e+00 : f32
    %50 = vector.broadcast %cst_19 : f32 to vector<64x32xf32>
    %51 = arith.subf %50, %49 : vector<64x32xf32>
    %52 = math.exp %51 : vector<64x32xf32>
    %cst_20 = arith.constant 0.000000e+00 : f32
    %53 = vector.broadcast %cst_20 : f32 to vector<64x32xf32>
    %54 = arith.cmpf oge, %48, %53 : vector<64x32xf32>
    %cst_21 = arith.constant 1.000000e+00 : f32
    %55 = vector.broadcast %cst_21 : f32 to vector<64x32xf32>
    %56 = arith.addf %55, %52 : vector<64x32xf32>
    %cst_22 = arith.constant 1.000000e+00 : f32
    %57 = vector.broadcast %cst_22 : f32 to vector<64x32xf32>
    %58 = arith.divf %57, %56 : vector<64x32xf32>
    %cst_23 = arith.constant 1.000000e+00 : f32
    %59 = vector.broadcast %cst_23 : f32 to vector<64x32xf32>
    %60 = arith.addf %59, %52 : vector<64x32xf32>
    %61 = arith.divf %52, %60 : vector<64x32xf32>
    %62 = arith.select %54, %58, %61 : vector<64x32xi1>, vector<64x32xf32>
    %63 = arith.mulf %48, %62 : vector<64x32xf32>
    %c0_24 = arith.constant 0 : index
    %c0_25 = arith.constant 0 : index
    %64 = vector.load %arg8[%c0_24, %c0_25] : memref<32x2xf32, #tpu.memory_space<vmem>>, vector<32x2xf32>
    %cst_26 = arith.constant dense<0.000000e+00> : vector<64x2xf32>
    %65 = tpu.matmul %63, %64, %cst_26 {dimension_numbers = #tpu.dot_dimension_numbers<[1], [0], [0], [1], [0, 0, 1, 1], [], []>} : vector<64x32xf32>, vector<32x2xf32>, vector<64x2xf32> -> vector<64x2xf32>
    %c0_27 = arith.constant 0 : index
    %c0_28 = arith.constant 0 : index
    %66 = vector.load %arg9[%c0_27, %c0_28] : memref<32x2xf32, #tpu.memory_space<vmem>>, vector<32x2xf32>
    %cst_29 = arith.constant dense<0.000000e+00> : vector<64x2xf32>
    %67 = tpu.matmul %63, %66, %cst_29 {dimension_numbers = #tpu.dot_dimension_numbers<[1], [0], [0], [1], [0, 0, 1, 1], [], []>} : vector<64x32xf32>, vector<32x2xf32>, vector<64x2xf32> -> vector<64x2xf32>
    %c0_30 = arith.constant 0 : index
    %c0_31 = arith.constant 0 : index
    %68 = vector.load %arg10[%c0_30, %c0_31] : memref<32x2xf32, #tpu.memory_space<vmem>>, vector<32x2xf32>
    %cst_32 = arith.constant dense<0.000000e+00> : vector<64x2xf32>
    %69 = tpu.matmul %63, %68, %cst_32 {dimension_numbers = #tpu.dot_dimension_numbers<[1], [0], [0], [1], [0, 0, 1, 1], [], []>} : vector<64x32xf32>, vector<32x2xf32>, vector<64x2xf32> -> vector<64x2xf32>
    %c0_33 = arith.constant 0 : index
    %c0_34 = arith.constant 0 : index
    %70 = vector.load %arg11[%c0_33, %c0_34] : memref<2x32xf32, #tpu.memory_space<vmem>>, vector<2x32xf32>
    %cst_35 = arith.constant dense<0.000000e+00> : vector<64x32xf32>
    %71 = tpu.matmul %65, %70, %cst_35 {dimension_numbers = #tpu.dot_dimension_numbers<[1], [0], [0], [1], [0, 0, 1, 1], [], []>} : vector<64x2xf32>, vector<2x32xf32>, vector<64x32xf32> -> vector<64x32xf32>
    %c0_36 = arith.constant 0 : index
    %c0_37 = arith.constant 0 : index
    %72 = vector.load %arg12[%c0_36, %c0_37] : memref<1x32xf32, #tpu.memory_space<vmem>>, vector<1x32xf32>
    %73 = vector.broadcast %72 : vector<1x32xf32> to vector<64x32xf32>
    %74 = arith.addf %71, %73 : vector<64x32xf32>
    %cst_38 = arith.constant 0.000000e+00 : f32
    %75 = vector.broadcast %cst_38 : f32 to vector<64x32xf32>
    %76 = arith.maximumf %74, %75 : vector<64x32xf32>
    %77 = math.absf %74 : vector<64x32xf32>
    %cst_39 = arith.constant 0.000000e+00 : f32
    %78 = vector.broadcast %cst_39 : f32 to vector<64x32xf32>
    %79 = arith.subf %78, %77 : vector<64x32xf32>
    %80 = math.exp %79 : vector<64x32xf32>
    %cst_40 = arith.constant 1.000000e+00 : f32
    %81 = vector.broadcast %cst_40 : f32 to vector<64x32xf32>
    %82 = arith.addf %81, %80 : vector<64x32xf32>
    %83 = math.log %82 : vector<64x32xf32>
    %84 = arith.addf %76, %83 : vector<64x32xf32>
    %c0_41 = arith.constant 0 : index
    %c0_42 = arith.constant 0 : index
    %85 = vector.load %arg14[%c0_41, %c0_42] : memref<1x32xf32, #tpu.memory_space<vmem>>, vector<1x32xf32>
    %86 = vector.broadcast %85 : vector<1x32xf32> to vector<64x32xf32>
    %87 = arith.mulf %63, %86 : vector<64x32xf32>
    %c0_43 = arith.constant 0 : index
    %c0_44 = arith.constant 0 : index
    %88 = vector.load %arg13[%c0_43, %c0_44] : memref<2x32xf32, #tpu.memory_space<vmem>>, vector<1x32xf32>
    %89 = vector.shape_cast %88 : vector<1x32xf32> to vector<32xf32>
    %90 = vector.shape_cast %89 : vector<32xf32> to vector<1x32xf32>
    %91 = vector.broadcast %90 : vector<1x32xf32> to vector<64x32xf32>
    %92 = arith.mulf %84, %91 : vector<64x32xf32>
    %93 = math.exp %92 : vector<64x32xf32>
    %c1_45 = arith.constant 1 : index
    %c0_46 = arith.constant 0 : index
    %94 = vector.load %arg13[%c1_45, %c0_46] : memref<2x32xf32, #tpu.memory_space<vmem>>, vector<1x32xf32>
    %95 = vector.shape_cast %94 : vector<1x32xf32> to vector<32xf32>
    %96 = vector.shape_cast %95 : vector<32xf32> to vector<1x32xf32>
    %97 = vector.broadcast %96 : vector<1x32xf32> to vector<64x32xf32>
    %98 = arith.mulf %84, %97 : vector<64x32xf32>
    %99 = math.exp %98 : vector<64x32xf32>
    %100 = vector.extract_strided_slice %67 {offsets = [0, 0], sizes = [64, 1], strides = [1, 1]} : vector<64x2xf32> to vector<64x1xf32>
    %101 = vector.broadcast %100 : vector<64x1xf32> to vector<64x32xf32>
    %102 = arith.mulf %84, %101 : vector<64x32xf32>
    %103 = vector.extract_strided_slice %67 {offsets = [0, 1], sizes = [64, 1], strides = [1, 1]} : vector<64x2xf32> to vector<64x1xf32>
    %104 = vector.broadcast %103 : vector<64x1xf32> to vector<64x32xf32>
    %105 = arith.mulf %84, %104 : vector<64x32xf32>
    %cst_47 = arith.constant 0.000000e+00 : f32
    %106 = vector.broadcast %cst_47 : f32 to vector<8x32xf32>
    %cst_48 = arith.constant 0.000000e+00 : f32
    %107 = vector.broadcast %cst_48 : f32 to vector<8x32xf32>
    %108 = vector.extract_strided_slice %87 {offsets = [0, 0], sizes = [8, 32], strides = [1, 1]} : vector<64x32xf32> to vector<8x32xf32>
    %109 = vector.extract_strided_slice %93 {offsets = [0, 0], sizes = [8, 32], strides = [1, 1]} : vector<64x32xf32> to vector<8x32xf32>
    %110 = arith.mulf %109, %106 : vector<8x32xf32>
    %111 = vector.extract_strided_slice %102 {offsets = [0, 0], sizes = [8, 32], strides = [1, 1]} : vector<64x32xf32> to vector<8x32xf32>
    %112 = arith.addf %110, %111 : vector<8x32xf32>
    %113 = vector.extract_strided_slice %69 {offsets = [0, 0], sizes = [8, 1], strides = [1, 1]} : vector<64x2xf32> to vector<8x1xf32>
    %114 = vector.broadcast %113 : vector<8x1xf32> to vector<8x32xf32>
    %115 = arith.mulf %112, %114 : vector<8x32xf32>
    %116 = arith.addf %108, %115 : vector<8x32xf32>
    %117 = vector.extract_strided_slice %99 {offsets = [0, 0], sizes = [8, 32], strides = [1, 1]} : vector<64x32xf32> to vector<8x32xf32>
    %118 = arith.mulf %117, %107 : vector<8x32xf32>
    %119 = vector.extract_strided_slice %105 {offsets = [0, 0], sizes = [8, 32], strides = [1, 1]} : vector<64x32xf32> to vector<8x32xf32>
    %120 = arith.addf %118, %119 : vector<8x32xf32>
    %121 = vector.extract_strided_slice %69 {offsets = [0, 1], sizes = [8, 1], strides = [1, 1]} : vector<64x2xf32> to vector<8x1xf32>
    %122 = vector.broadcast %121 : vector<8x1xf32> to vector<8x32xf32>
    %123 = arith.mulf %120, %122 : vector<8x32xf32>
    %124 = arith.addf %116, %123 : vector<8x32xf32>
    %c0_49 = arith.constant 0 : index
    %c0_50 = arith.constant 0 : index
    %125 = vector.load %arg17[%c0_49, %c0_50] : memref<64x32xf32, #tpu.memory_space<vmem>>, vector<8x32xf32>
    tpu.vector_store %arg17[%c0_49, %c0_50], %124 {strides = array<i32>} : memref<64x32xf32, #tpu.memory_space<vmem>>, vector<8x32xf32>,
    %126 = vector.extract_strided_slice %87 {offsets = [8, 0], sizes = [8, 32], strides = [1, 1]} : vector<64x32xf32> to vector<8x32xf32>
    %127 = vector.extract_strided_slice %93 {offsets = [8, 0], sizes = [8, 32], strides = [1, 1]} : vector<64x32xf32> to vector<8x32xf32>
    %128 = arith.mulf %127, %112 : vector<8x32xf32>
    %129 = vector.extract_strided_slice %102 {offsets = [8, 0], sizes = [8, 32], strides = [1, 1]} : vector<64x32xf32> to vector<8x32xf32>
    %130 = arith.addf %128, %129 : vector<8x32xf32>
    %131 = vector.extract_strided_slice %69 {offsets = [8, 0], sizes = [8, 1], strides = [1, 1]} : vector<64x2xf32> to vector<8x1xf32>
    %132 = vector.broadcast %131 : vector<8x1xf32> to vector<8x32xf32>
    %133 = arith.mulf %130, %132 : vector<8x32xf32>
    %134 = arith.addf %126, %133 : vector<8x32xf32>
    %135 = vector.extract_strided_slice %99 {offsets = [8, 0], sizes = [8, 32], strides = [1, 1]} : vector<64x32xf32> to vector<8x32xf32>
    %136 = arith.mulf %135, %120 : vector<8x32xf32>
    %137 = vector.extract_strided_slice %105 {offsets = [8, 0], sizes = [8, 32], strides = [1, 1]} : vector<64x32xf32> to vector<8x32xf32>
    %138 = arith.addf %136, %137 : vector<8x32xf32>
    %139 = vector.extract_strided_slice %69 {offsets = [8, 1], sizes = [8, 1], strides = [1, 1]} : vector<64x2xf32> to vector<8x1xf32>
    %140 = vector.broadcast %139 : vector<8x1xf32> to vector<8x32xf32>
    %141 = arith.mulf %138, %140 : vector<8x32xf32>
    %142 = arith.addf %134, %141 : vector<8x32xf32>
    %c8 = arith.constant 8 : index
    %c0_51 = arith.constant 0 : index
    %143 = vector.load %arg17[%c8, %c0_51] : memref<64x32xf32, #tpu.memory_space<vmem>>, vector<8x32xf32>
    tpu.vector_store %arg17[%c8, %c0_51], %142 {strides = array<i32>} : memref<64x32xf32, #tpu.memory_space<vmem>>, vector<8x32xf32>,
    %144 = vector.extract_strided_slice %87 {offsets = [16, 0], sizes = [8, 32], strides = [1, 1]} : vector<64x32xf32> to vector<8x32xf32>
    %145 = vector.extract_strided_slice %93 {offsets = [16, 0], sizes = [8, 32], strides = [1, 1]} : vector<64x32xf32> to vector<8x32xf32>
    %146 = arith.mulf %145, %130 : vector<8x32xf32>
    %147 = vector.extract_strided_slice %102 {offsets = [16, 0], sizes = [8, 32], strides = [1, 1]} : vector<64x32xf32> to vector<8x32xf32>
    %148 = arith.addf %146, %147 : vector<8x32xf32>
    %149 = vector.extract_strided_slice %69 {offsets = [16, 0], sizes = [8, 1], strides = [1, 1]} : vector<64x2xf32> to vector<8x1xf32>
    %150 = vector.broadcast %149 : vector<8x1xf32> to vector<8x32xf32>
    %151 = arith.mulf %148, %150 : vector<8x32xf32>
    %152 = arith.addf %144, %151 : vector<8x32xf32>
    %153 = vector.extract_strided_slice %99 {offsets = [16, 0], sizes = [8, 32], strides = [1, 1]} : vector<64x32xf32> to vector<8x32xf32>
    %154 = arith.mulf %153, %138 : vector<8x32xf32>
    %155 = vector.extract_strided_slice %105 {offsets = [16, 0], sizes = [8, 32], strides = [1, 1]} : vector<64x32xf32> to vector<8x32xf32>
    %156 = arith.addf %154, %155 : vector<8x32xf32>
    %157 = vector.extract_strided_slice %69 {offsets = [16, 1], sizes = [8, 1], strides = [1, 1]} : vector<64x2xf32> to vector<8x1xf32>
    %158 = vector.broadcast %157 : vector<8x1xf32> to vector<8x32xf32>
    %159 = arith.mulf %156, %158 : vector<8x32xf32>
    %160 = arith.addf %152, %159 : vector<8x32xf32>
    %c16 = arith.constant 16 : index
    %c0_52 = arith.constant 0 : index
    %161 = vector.load %arg17[%c16, %c0_52] : memref<64x32xf32, #tpu.memory_space<vmem>>, vector<8x32xf32>
    tpu.vector_store %arg17[%c16, %c0_52], %160 {strides = array<i32>} : memref<64x32xf32, #tpu.memory_space<vmem>>, vector<8x32xf32>,
    %162 = vector.extract_strided_slice %87 {offsets = [24, 0], sizes = [8, 32], strides = [1, 1]} : vector<64x32xf32> to vector<8x32xf32>
    %163 = vector.extract_strided_slice %93 {offsets = [24, 0], sizes = [8, 32], strides = [1, 1]} : vector<64x32xf32> to vector<8x32xf32>
    %164 = arith.mulf %163, %148 : vector<8x32xf32>
    %165 = vector.extract_strided_slice %102 {offsets = [24, 0], sizes = [8, 32], strides = [1, 1]} : vector<64x32xf32> to vector<8x32xf32>
    %166 = arith.addf %164, %165 : vector<8x32xf32>
    %167 = vector.extract_strided_slice %69 {offsets = [24, 0], sizes = [8, 1], strides = [1, 1]} : vector<64x2xf32> to vector<8x1xf32>
    %168 = vector.broadcast %167 : vector<8x1xf32> to vector<8x32xf32>
    %169 = arith.mulf %166, %168 : vector<8x32xf32>
    %170 = arith.addf %162, %169 : vector<8x32xf32>
    %171 = vector.extract_strided_slice %99 {offsets = [24, 0], sizes = [8, 32], strides = [1, 1]} : vector<64x32xf32> to vector<8x32xf32>
    %172 = arith.mulf %171, %156 : vector<8x32xf32>
    %173 = vector.extract_strided_slice %105 {offsets = [24, 0], sizes = [8, 32], strides = [1, 1]} : vector<64x32xf32> to vector<8x32xf32>
    %174 = arith.addf %172, %173 : vector<8x32xf32>
    %175 = vector.extract_strided_slice %69 {offsets = [24, 1], sizes = [8, 1], strides = [1, 1]} : vector<64x2xf32> to vector<8x1xf32>
    %176 = vector.broadcast %175 : vector<8x1xf32> to vector<8x32xf32>
    %177 = arith.mulf %174, %176 : vector<8x32xf32>
    %178 = arith.addf %170, %177 : vector<8x32xf32>
    %c24 = arith.constant 24 : index
    %c0_53 = arith.constant 0 : index
    %179 = vector.load %arg17[%c24, %c0_53] : memref<64x32xf32, #tpu.memory_space<vmem>>, vector<8x32xf32>
    tpu.vector_store %arg17[%c24, %c0_53], %178 {strides = array<i32>} : memref<64x32xf32, #tpu.memory_space<vmem>>, vector<8x32xf32>,
    %180 = vector.extract_strided_slice %87 {offsets = [32, 0], sizes = [8, 32], strides = [1, 1]} : vector<64x32xf32> to vector<8x32xf32>
    %181 = vector.extract_strided_slice %93 {offsets = [32, 0], sizes = [8, 32], strides = [1, 1]} : vector<64x32xf32> to vector<8x32xf32>
    %182 = arith.mulf %181, %166 : vector<8x32xf32>
    %183 = vector.extract_strided_slice %102 {offsets = [32, 0], sizes = [8, 32], strides = [1, 1]} : vector<64x32xf32> to vector<8x32xf32>
    %184 = arith.addf %182, %183 : vector<8x32xf32>
    %185 = vector.extract_strided_slice %69 {offsets = [32, 0], sizes = [8, 1], strides = [1, 1]} : vector<64x2xf32> to vector<8x1xf32>
    %186 = vector.broadcast %185 : vector<8x1xf32> to vector<8x32xf32>
    %187 = arith.mulf %184, %186 : vector<8x32xf32>
    %188 = arith.addf %180, %187 : vector<8x32xf32>
    %189 = vector.extract_strided_slice %99 {offsets = [32, 0], sizes = [8, 32], strides = [1, 1]} : vector<64x32xf32> to vector<8x32xf32>
    %190 = arith.mulf %189, %174 : vector<8x32xf32>
    %191 = vector.extract_strided_slice %105 {offsets = [32, 0], sizes = [8, 32], strides = [1, 1]} : vector<64x32xf32> to vector<8x32xf32>
    %192 = arith.addf %190, %191 : vector<8x32xf32>
    %193 = vector.extract_strided_slice %69 {offsets = [32, 1], sizes = [8, 1], strides = [1, 1]} : vector<64x2xf32> to vector<8x1xf32>
    %194 = vector.broadcast %193 : vector<8x1xf32> to vector<8x32xf32>
    %195 = arith.mulf %192, %194 : vector<8x32xf32>
    %196 = arith.addf %188, %195 : vector<8x32xf32>
    %c32 = arith.constant 32 : index
    %c0_54 = arith.constant 0 : index
    %197 = vector.load %arg17[%c32, %c0_54] : memref<64x32xf32, #tpu.memory_space<vmem>>, vector<8x32xf32>
    tpu.vector_store %arg17[%c32, %c0_54], %196 {strides = array<i32>} : memref<64x32xf32, #tpu.memory_space<vmem>>, vector<8x32xf32>,
    %198 = vector.extract_strided_slice %87 {offsets = [40, 0], sizes = [8, 32], strides = [1, 1]} : vector<64x32xf32> to vector<8x32xf32>
    %199 = vector.extract_strided_slice %93 {offsets = [40, 0], sizes = [8, 32], strides = [1, 1]} : vector<64x32xf32> to vector<8x32xf32>
    %200 = arith.mulf %199, %184 : vector<8x32xf32>
    %201 = vector.extract_strided_slice %102 {offsets = [40, 0], sizes = [8, 32], strides = [1, 1]} : vector<64x32xf32> to vector<8x32xf32>
    %202 = arith.addf %200, %201 : vector<8x32xf32>
    %203 = vector.extract_strided_slice %69 {offsets = [40, 0], sizes = [8, 1], strides = [1, 1]} : vector<64x2xf32> to vector<8x1xf32>
    %204 = vector.broadcast %203 : vector<8x1xf32> to vector<8x32xf32>
    %205 = arith.mulf %202, %204 : vector<8x32xf32>
    %206 = arith.addf %198, %205 : vector<8x32xf32>
    %207 = vector.extract_strided_slice %99 {offsets = [40, 0], sizes = [8, 32], strides = [1, 1]} : vector<64x32xf32> to vector<8x32xf32>
    %208 = arith.mulf %207, %192 : vector<8x32xf32>
    %209 = vector.extract_strided_slice %105 {offsets = [40, 0], sizes = [8, 32], strides = [1, 1]} : vector<64x32xf32> to vector<8x32xf32>
    %210 = arith.addf %208, %209 : vector<8x32xf32>
    %211 = vector.extract_strided_slice %69 {offsets = [40, 1], sizes = [8, 1], strides = [1, 1]} : vector<64x2xf32> to vector<8x1xf32>
    %212 = vector.broadcast %211 : vector<8x1xf32> to vector<8x32xf32>
    %213 = arith.mulf %210, %212 : vector<8x32xf32>
    %214 = arith.addf %206, %213 : vector<8x32xf32>
    %c40 = arith.constant 40 : index
    %c0_55 = arith.constant 0 : index
    %215 = vector.load %arg17[%c40, %c0_55] : memref<64x32xf32, #tpu.memory_space<vmem>>, vector<8x32xf32>
    tpu.vector_store %arg17[%c40, %c0_55], %214 {strides = array<i32>} : memref<64x32xf32, #tpu.memory_space<vmem>>, vector<8x32xf32>,
    %216 = vector.extract_strided_slice %87 {offsets = [48, 0], sizes = [8, 32], strides = [1, 1]} : vector<64x32xf32> to vector<8x32xf32>
    %217 = vector.extract_strided_slice %93 {offsets = [48, 0], sizes = [8, 32], strides = [1, 1]} : vector<64x32xf32> to vector<8x32xf32>
    %218 = arith.mulf %217, %202 : vector<8x32xf32>
    %219 = vector.extract_strided_slice %102 {offsets = [48, 0], sizes = [8, 32], strides = [1, 1]} : vector<64x32xf32> to vector<8x32xf32>
    %220 = arith.addf %218, %219 : vector<8x32xf32>
    %221 = vector.extract_strided_slice %69 {offsets = [48, 0], sizes = [8, 1], strides = [1, 1]} : vector<64x2xf32> to vector<8x1xf32>
    %222 = vector.broadcast %221 : vector<8x1xf32> to vector<8x32xf32>
    %223 = arith.mulf %220, %222 : vector<8x32xf32>
    %224 = arith.addf %216, %223 : vector<8x32xf32>
    %225 = vector.extract_strided_slice %99 {offsets = [48, 0], sizes = [8, 32], strides = [1, 1]} : vector<64x32xf32> to vector<8x32xf32>
    %226 = arith.mulf %225, %210 : vector<8x32xf32>
    %227 = vector.extract_strided_slice %105 {offsets = [48, 0], sizes = [8, 32], strides = [1, 1]} : vector<64x32xf32> to vector<8x32xf32>
    %228 = arith.addf %226, %227 : vector<8x32xf32>
    %229 = vector.extract_strided_slice %69 {offsets = [48, 1], sizes = [8, 1], strides = [1, 1]} : vector<64x2xf32> to vector<8x1xf32>
    %230 = vector.broadcast %229 : vector<8x1xf32> to vector<8x32xf32>
    %231 = arith.mulf %228, %230 : vector<8x32xf32>
    %232 = arith.addf %224, %231 : vector<8x32xf32>
    %c48 = arith.constant 48 : index
    %c0_56 = arith.constant 0 : index
    %233 = vector.load %arg17[%c48, %c0_56] : memref<64x32xf32, #tpu.memory_space<vmem>>, vector<8x32xf32>
    tpu.vector_store %arg17[%c48, %c0_56], %232 {strides = array<i32>} : memref<64x32xf32, #tpu.memory_space<vmem>>, vector<8x32xf32>,
    %234 = vector.extract_strided_slice %87 {offsets = [56, 0], sizes = [8, 32], strides = [1, 1]} : vector<64x32xf32> to vector<8x32xf32>
    %235 = vector.extract_strided_slice %93 {offsets = [56, 0], sizes = [8, 32], strides = [1, 1]} : vector<64x32xf32> to vector<8x32xf32>
    %236 = arith.mulf %235, %220 : vector<8x32xf32>
    %237 = vector.extract_strided_slice %102 {offsets = [56, 0], sizes = [8, 32], strides = [1, 1]} : vector<64x32xf32> to vector<8x32xf32>
    %238 = arith.addf %236, %237 : vector<8x32xf32>
    %239 = vector.extract_strided_slice %69 {offsets = [56, 0], sizes = [8, 1], strides = [1, 1]} : vector<64x2xf32> to vector<8x1xf32>
    %240 = vector.broadcast %239 : vector<8x1xf32> to vector<8x32xf32>
    %241 = arith.mulf %238, %240 : vector<8x32xf32>
    %242 = arith.addf %234, %241 : vector<8x32xf32>
    %243 = vector.extract_strided_slice %99 {offsets = [56, 0], sizes = [8, 32], strides = [1, 1]} : vector<64x32xf32> to vector<8x32xf32>
    %244 = arith.mulf %243, %228 : vector<8x32xf32>
    %245 = vector.extract_strided_slice %105 {offsets = [56, 0], sizes = [8, 32], strides = [1, 1]} : vector<64x32xf32> to vector<8x32xf32>
    %246 = arith.addf %244, %245 : vector<8x32xf32>
    %247 = vector.extract_strided_slice %69 {offsets = [56, 1], sizes = [8, 1], strides = [1, 1]} : vector<64x2xf32> to vector<8x1xf32>
    %248 = vector.broadcast %247 : vector<8x1xf32> to vector<8x32xf32>
    %249 = arith.mulf %246, %248 : vector<8x32xf32>
    %250 = arith.addf %242, %249 : vector<8x32xf32>
    %c56 = arith.constant 56 : index
    %c0_57 = arith.constant 0 : index
    %251 = vector.load %arg17[%c56, %c0_57] : memref<64x32xf32, #tpu.memory_space<vmem>>, vector<8x32xf32>
    tpu.vector_store %arg17[%c56, %c0_57], %250 {strides = array<i32>} : memref<64x32xf32, #tpu.memory_space<vmem>>, vector<8x32xf32>,
    %c0_58 = arith.constant 0 : index
    %c0_59 = arith.constant 0 : index
    %252 = vector.load %arg17[%c0_58, %c0_59] : memref<64x32xf32, #tpu.memory_space<vmem>>, vector<64x32xf32>
    %253 = math.absf %17 : vector<64x32xf32>
    %cst_60 = arith.constant 0.000000e+00 : f32
    %254 = vector.broadcast %cst_60 : f32 to vector<64x32xf32>
    %255 = arith.subf %254, %253 : vector<64x32xf32>
    %256 = math.exp %255 : vector<64x32xf32>
    %cst_61 = arith.constant 0.000000e+00 : f32
    %257 = vector.broadcast %cst_61 : f32 to vector<64x32xf32>
    %258 = arith.cmpf oge, %17, %257 : vector<64x32xf32>
    %cst_62 = arith.constant 1.000000e+00 : f32
    %259 = vector.broadcast %cst_62 : f32 to vector<64x32xf32>
    %260 = arith.addf %259, %256 : vector<64x32xf32>
    %cst_63 = arith.constant 1.000000e+00 : f32
    %261 = vector.broadcast %cst_63 : f32 to vector<64x32xf32>
    %262 = arith.divf %261, %260 : vector<64x32xf32>
    %cst_64 = arith.constant 1.000000e+00 : f32
    %263 = vector.broadcast %cst_64 : f32 to vector<64x32xf32>
    %264 = arith.addf %263, %256 : vector<64x32xf32>
    %265 = arith.divf %256, %264 : vector<64x32xf32>
    %266 = arith.select %258, %262, %265 : vector<64x32xi1>, vector<64x32xf32>
    %267 = arith.mulf %17, %266 : vector<64x32xf32>
    %268 = arith.mulf %252, %267 : vector<64x32xf32>
    %c0_65 = arith.constant 0 : index
    %c0_66 = arith.constant 0 : index
    %269 = vector.load %arg15[%c0_65, %c0_66] : memref<32x32xf32, #tpu.memory_space<vmem>>, vector<32x32xf32>
    %cst_67 = arith.constant dense<0.000000e+00> : vector<64x32xf32>
    %270 = tpu.matmul %268, %269, %cst_67 {dimension_numbers = #tpu.dot_dimension_numbers<[1], [0], [0], [1], [0, 0, 1, 1], [], []>} : vector<64x32xf32>, vector<32x32xf32>, vector<64x32xf32> -> vector<64x32xf32>
    %c0_68 = arith.constant 0 : index
    %c0_69 = arith.constant 0 : index
    %271 = vector.load %arg2[%c0_68, %c0_69] : memref<64x32xf32, #tpu.memory_space<vmem>>, vector<64x32xf32>
    %272 = arith.mulf %271, %271 : vector<64x32xf32>
    %cst_70 = arith.constant dense<0.000000e+00> : vector<64xf32>
    %273 = vector.multi_reduction <add>, %272, %cst_70 [1] : vector<64x32xf32> to vector<64xf32>
    %274 = vector.shape_cast %273 : vector<64xf32> to vector<64x1xf32>
    %cst_71 = arith.constant 3.200000e+01 : f32
    %275 = vector.broadcast %cst_71 : f32 to vector<64x1xf32>
    %276 = arith.divf %274, %275 : vector<64x1xf32>
    %cst_72 = arith.constant 9.99999974E-6 : f32
    %277 = vector.broadcast %cst_72 : f32 to vector<64x1xf32>
    %278 = arith.addf %276, %277 : vector<64x1xf32>
    %279 = math.rsqrt %278 : vector<64x1xf32>
    %280 = vector.broadcast %279 : vector<64x1xf32> to vector<64x32xf32>
    %281 = arith.mulf %271, %280 : vector<64x32xf32>
    %c0_73 = arith.constant 0 : index
    %c0_74 = arith.constant 0 : index
    %282 = vector.load %arg3[%c0_73, %c0_74] : memref<1x32xf32, #tpu.memory_space<vmem>>, vector<1x32xf32>
    %283 = vector.broadcast %282 : vector<1x32xf32> to vector<64x32xf32>
    %284 = arith.mulf %281, %283 : vector<64x32xf32>
    %285 = arith.addf %270, %284 : vector<64x32xf32>
    %c0_75 = arith.constant 0 : index
    %c0_76 = arith.constant 0 : index
    %286 = vector.load %arg16[%c0_75, %c0_76] : memref<64x32xf32, #tpu.memory_space<vmem>>, vector<64x32xf32>
    tpu.vector_store %arg16[%c0_75, %c0_76], %285 {strides = array<i32>} : memref<64x32xf32, #tpu.memory_space<vmem>>, vector<64x32xf32>,
    return
  }
  func.func @transform_0(%arg0: i32) -> (i32, i32) {
    %c0_i32 = arith.constant 0 : i32
    %c0_i32_0 = arith.constant 0 : i32
    %c0_i32_1 = arith.constant 0 : i32
    return %c0_i32, %c0_i32_0 : i32, i32
  }
  func.func @transform_1(%arg0: i32) -> (i32, i32) {
    %c0_i32 = arith.constant 0 : i32
    %c0_i32_0 = arith.constant 0 : i32
    %c0_i32_1 = arith.constant 0 : i32
    return %c0_i32, %c0_i32_0 : i32, i32
  }
  func.func @transform_2(%arg0: i32) -> (i32, i32) {
    %c0_i32 = arith.constant 0 : i32
    %c0_i32_0 = arith.constant 0 : i32
    %c0_i32_1 = arith.constant 0 : i32
    return %c0_i32, %c0_i32_0 : i32, i32
  }
  func.func @transform_3(%arg0: i32) -> (i32, i32) {
    %c0_i32 = arith.constant 0 : i32
    %c0_i32_0 = arith.constant 0 : i32
    %c0_i32_1 = arith.constant 0 : i32
    return %c0_i32, %c0_i32_0 : i32, i32
  }
  func.func @transform_4(%arg0: i32) -> (i32, i32) {
    %c0_i32 = arith.constant 0 : i32
    %c0_i32_0 = arith.constant 0 : i32
    %c0_i32_1 = arith.constant 0 : i32
    return %c0_i32, %c0_i32_0 : i32, i32
  }
  func.func @transform_5(%arg0: i32) -> (i32, i32) {
    %c0_i32 = arith.constant 0 : i32
    %c0_i32_0 = arith.constant 0 : i32
    %c0_i32_1 = arith.constant 0 : i32
    return %c0_i32, %c0_i32_0 : i32, i32
  }
  func.func @transform_6(%arg0: i32) -> (i32, i32) {
    %c0_i32 = arith.constant 0 : i32
    %c0_i32_0 = arith.constant 0 : i32
    %c0_i32_1 = arith.constant 0 : i32
    return %c0_i32, %c0_i32_0 : i32, i32
  }
  func.func @transform_7(%arg0: i32) -> (i32, i32) {
    %c0_i32 = arith.constant 0 : i32
    %c0_i32_0 = arith.constant 0 : i32
    %c0_i32_1 = arith.constant 0 : i32
    return %c0_i32, %c0_i32_0 : i32, i32
  }
  func.func @transform_8(%arg0: i32) -> (i32, i32) {
    %c0_i32 = arith.constant 0 : i32
    %c0_i32_0 = arith.constant 0 : i32
    %c0_i32_1 = arith.constant 0 : i32
    return %c0_i32, %c0_i32_0 : i32, i32
  }
  func.func @transform_9(%arg0: i32) -> (i32, i32) {
    %c0_i32 = arith.constant 0 : i32
    %c0_i32_0 = arith.constant 0 : i32
    %c0_i32_1 = arith.constant 0 : i32
    return %c0_i32, %c0_i32_0 : i32, i32
  }
  func.func @transform_10(%arg0: i32) -> (i32, i32) {
    %c0_i32 = arith.constant 0 : i32
    %c0_i32_0 = arith.constant 0 : i32
    %c0_i32_1 = arith.constant 0 : i32
    return %c0_i32, %c0_i32_0 : i32, i32
  }
  func.func @transform_11(%arg0: i32) -> (i32, i32) {
    %c0_i32 = arith.constant 0 : i32
    %c0_i32_0 = arith.constant 0 : i32
    %c0_i32_1 = arith.constant 0 : i32
    return %c0_i32, %c0_i32_0 : i32, i32
  }
  func.func @transform_12(%arg0: i32) -> (i32, i32) {
    %c0_i32 = arith.constant 0 : i32
    %c0_i32_0 = arith.constant 0 : i32
    %c0_i32_1 = arith.constant 0 : i32
    return %c0_i32, %c0_i32_0 : i32, i32
  }
  func.func @transform_13(%arg0: i32) -> (i32, i32) {
    %c0_i32 = arith.constant 0 : i32
    %c0_i32_0 = arith.constant 0 : i32
    %c0_i32_1 = arith.constant 0 : i32
    return %c0_i32, %c0_i32_0 : i32, i32
  }
  func.func @transform_14(%arg0: i32) -> (i32, i32) {
    %c0_i32 = arith.constant 0 : i32
    %c0_i32_0 = arith.constant 0 : i32
    %c0_i32_1 = arith.constant 0 : i32
    return %c0_i32, %c0_i32_0 : i32, i32
  }
  func.func @transform_15(%arg0: i32) -> (i32, i32) {
    %c0_i32 = arith.constant 0 : i32
    %c0_i32_0 = arith.constant 0 : i32
    %c0_i32_1 = arith.constant 0 : i32
    return %c0_i32, %c0_i32_0 : i32, i32
  }
}

</mosaic_0001>

<llo_original>
// kernel: tpu_custom_call.1
$region0: #{tpu_custom_call.1}
  #allocation0 [shape = 'u32[]', space=smem, size = 0x4, offset = 0x4, fixed_abs, tag = 'smem constant byte address 0x4 - core index']
  #allocation1 [shape = 'u32[72,128]{1,0:T(1,128)}', space=vmem, size = 0x9000, scoped, tag = 'internal scratch']
  #allocation2 [shape = 'f32[64,32]{1,0:T(8,128)}', space=vmem, size = 0x8000, scoped, tag = 'scratch operand']
  %s0 = inlined_call_operand.vmem [shape: f32[64,32], index: 0, kind: input, shape index: {}]
  %s1 = inlined_call_operand.vmem [shape: f32[64,32], index: 1, kind: input, shape index: {}]
  %s2 = inlined_call_operand.vmem [shape: f32[1,32], index: 2, kind: input, shape index: {}]
  %s3 = inlined_call_operand.vmem [shape: f32[32,32], index: 3, kind: input, shape index: {}]
  %s4 = inlined_call_operand.vmem [shape: f32[32,32], index: 4, kind: input, shape index: {}]
  %s5 = inlined_call_operand.vmem [shape: f32[4,32], index: 5, kind: input, shape index: {}]
  %s6 = inlined_call_operand.vmem [shape: f32[1,32], index: 6, kind: input, shape index: {}]
  %s7 = inlined_call_operand.vmem [shape: f32[32,2], index: 7, kind: input, shape index: {}]
  %s8 = inlined_call_operand.vmem [shape: f32[32,2], index: 8, kind: input, shape index: {}]
  %s9 = inlined_call_operand.vmem [shape: f32[32,2], index: 9, kind: input, shape index: {}]
  %s10 = inlined_call_operand.vmem [shape: f32[2,32], index: 10, kind: input, shape index: {}]
  %s11 = inlined_call_operand.vmem [shape: f32[1,32], index: 11, kind: input, shape index: {}]
  %s12 = inlined_call_operand.vmem [shape: f32[2,32], index: 12, kind: input, shape index: {}]
  %s13 = inlined_call_operand.vmem [shape: f32[1,32], index: 13, kind: input, shape index: {}]
  %s14 = inlined_call_operand.vmem [shape: f32[32,32], index: 14, kind: input, shape index: {}]
  %s15 = inlined_call_operand.vmem [shape: f32[64,32], index: 15, kind: output, shape index: {}]
  %s16 = sld [smem:[#allocation0]]
  $region70: #{tpu_custom_call.1} parent=0
    _
  %s18 = ssub.s32 1, %s16
  %s19 = scalar_select 0, %s18, %s16
  // Predicated region
  $region2: #{tpu_custom_call.1} parent=0 // pred_check
    _
  $region3: #{tpu_custom_call.1} parent=0 // pred_check_branch
    %21 = sbr.rel (0) target = $region5
  $region4: #{tpu_custom_call.1} parent=0 // pred_region
    _
  $region5: #{tpu_custom_call.1} parent=0 // pred_fallthru
    _
  // Predicated region
  $region6: #{tpu_custom_call.1} parent=0 // pred_check
    _
  $region7: #{tpu_custom_call.1} parent=0 // pred_check_branch
    %23 = sbr.rel (0) target = $region9
  $region8: #{tpu_custom_call.1} parent=0 // pred_region
    _
  $region9: #{tpu_custom_call.1} parent=0 // pred_fallthru
    _
  // Predicated region
  $region10: #{tpu_custom_call.1} parent=0 // pred_check
    _
  $region11: #{tpu_custom_call.1} parent=0 // pred_check_branch
    %25 = sbr.rel (0) target = $region13
  $region12: #{tpu_custom_call.1} parent=0 // pred_region
    _
  $region13: #{tpu_custom_call.1} parent=0 // pred_fallthru
    _
  // Predicated region
  $region14: #{tpu_custom_call.1} parent=0 // pred_check
    _
  $region15: #{tpu_custom_call.1} parent=0 // pred_check_branch
    %27 = sbr.rel (0) target = $region17
  $region16: #{tpu_custom_call.1} parent=0 // pred_region
    _
  $region17: #{tpu_custom_call.1} parent=0 // pred_fallthru
    _
  // Predicated region
  $region18: #{tpu_custom_call.1} parent=0 // pred_check
    _
  $region19: #{tpu_custom_call.1} parent=0 // pred_check_branch
    %29 = sbr.rel (0) target = $region21
  $region20: #{tpu_custom_call.1} parent=0 // pred_region
    _
  $region21: #{tpu_custom_call.1} parent=0 // pred_fallthru
    _
  // Predicated region
  $region22: #{tpu_custom_call.1} parent=0 // pred_check
    _
  $region23: #{tpu_custom_call.1} parent=0 // pred_check_branch
    %31 = sbr.rel (0) target = $region25
  $region24: #{tpu_custom_call.1} parent=0 // pred_region
    _
  $region25: #{tpu_custom_call.1} parent=0 // pred_fallthru
    _
  // Predicated region
  $region26: #{tpu_custom_call.1} parent=0 // pred_check
    _
  $region27: #{tpu_custom_call.1} parent=0 // pred_check_branch
    %33 = sbr.rel (0) target = $region29
  $region28: #{tpu_custom_call.1} parent=0 // pred_region
    _
  $region29: #{tpu_custom_call.1} parent=0 // pred_fallthru
    _
  // Predicated region
  $region30: #{tpu_custom_call.1} parent=0 // pred_check
    _
  $region31: #{tpu_custom_call.1} parent=0 // pred_check_branch
    %35 = sbr.rel (0) target = $region33
  $region32: #{tpu_custom_call.1} parent=0 // pred_region
    _
  $region33: #{tpu_custom_call.1} parent=0 // pred_fallthru
    _
  // Predicated region
  $region34: #{tpu_custom_call.1} parent=0 // pred_check
    _
  $region35: #{tpu_custom_call.1} parent=0 // pred_check_branch
    %37 = sbr.rel (0) target = $region37
  $region36: #{tpu_custom_call.1} parent=0 // pred_region
    _
  $region37: #{tpu_custom_call.1} parent=0 // pred_fallthru
    _
  // Predicated region
  $region38: #{tpu_custom_call.1} parent=0 // pred_check
    _
  $region39: #{tpu_custom_call.1} parent=0 // pred_check_branch
    %39 = sbr.rel (0) target = $region41
  $region40: #{tpu_custom_call.1} parent=0 // pred_region
    _
  $region41: #{tpu_custom_call.1} parent=0 // pred_fallthru
    _
  // Predicated region
  $region42: #{tpu_custom_call.1} parent=0 // pred_check
    _
  $region43: #{tpu_custom_call.1} parent=0 // pred_check_branch
    %41 = sbr.rel (0) target = $region45
  $region44: #{tpu_custom_call.1} parent=0 // pred_region
    _
  $region45: #{tpu_custom_call.1} parent=0 // pred_fallthru
    _
  // Predicated region
  $region46: #{tpu_custom_call.1} parent=0 // pred_check
    _
  $region47: #{tpu_custom_call.1} parent=0 // pred_check_branch
    %43 = sbr.rel (0) target = $region49
  $region48: #{tpu_custom_call.1} parent=0 // pred_region
    _
  $region49: #{tpu_custom_call.1} parent=0 // pred_fallthru
    _
  // Predicated region
  $region50: #{tpu_custom_call.1} parent=0 // pred_check
    _
  $region51: #{tpu_custom_call.1} parent=0 // pred_check_branch
    %45 = sbr.rel (0) target = $region53
  $region52: #{tpu_custom_call.1} parent=0 // pred_region
    _
  $region53: #{tpu_custom_call.1} parent=0 // pred_fallthru
    _
  // Predicated region
  $region54: #{tpu_custom_call.1} parent=0 // pred_check
    _
  $region55: #{tpu_custom_call.1} parent=0 // pred_check_branch
    %47 = sbr.rel (0) target = $region57
  $region56: #{tpu_custom_call.1} parent=0 // pred_region
    _
  $region57: #{tpu_custom_call.1} parent=0 // pred_fallthru
    _
  // Predicated region
  $region58: #{tpu_custom_call.1} parent=0 // pred_check
    _
  $region59: #{tpu_custom_call.1} parent=0 // pred_check_branch
    %49 = sbr.rel (0) target = $region61
  $region60: #{tpu_custom_call.1} parent=0 // pred_region
    _
  $region61: #{tpu_custom_call.1} parent=0 // pred_fallthru
    _
  %v50 = vld [vmem:[%s0] sm:$0xff]
  %v51 = vld [vmem:[%s0 + $0x8] sm:$0xff]
  %v52 = vld [vmem:[%s0 + $0x10] sm:$0xff]
  %v53 = vld [vmem:[%s0 + $0x18] sm:$0xff]
  %v54 = vld [vmem:[%s0 + $0x20] sm:$0xff]
  %v55 = vld [vmem:[%s0 + $0x28] sm:$0xff]
  %v56 = vld [vmem:[%s0 + $0x30] sm:$0xff]
  %v57 = vld [vmem:[%s0 + $0x38] sm:$0xff]
  %v58 = vmul.f32 %v50, %v50
  %v59 = vmul.f32 %v51, %v51
  %v60 = vmul.f32 %v52, %v52
  %v61 = vmul.f32 %v53, %v53
  %v62 = vmul.f32 %v54, %v54
  %v63 = vmul.f32 %v55, %v55
  %v64 = vmul.f32 %v56, %v56
  %v65 = vmul.f32 %v57, %v57
  %vm66 = vcmask 261120
  %v67 = vsel %vm66, %v58, 0.0
  %68 = vadd.xlane.f32.xlu0 %v67
  %v69 = vpop.xlane.xlu0 %68
  %v70 = vsel %vm66, %v59, 0.0
  %71 = vadd.xlane.f32.xlu0 %v70
  %v72 = vpop.xlane.xlu0 %71
  %v73 = vsel %vm66, %v60, 0.0
  %74 = vadd.xlane.f32.xlu0 %v73
  %v75 = vpop.xlane.xlu0 %74
  %v76 = vsel %vm66, %v61, 0.0
  %77 = vadd.xlane.f32.xlu0 %v76
  %v78 = vpop.xlane.xlu0 %77
  %v79 = vsel %vm66, %v62, 0.0
  %80 = vadd.xlane.f32.xlu0 %v79
  %v81 = vpop.xlane.xlu0 %80
  %v82 = vsel %vm66, %v63, 0.0
  %83 = vadd.xlane.f32.xlu0 %v82
  %v84 = vpop.xlane.xlu0 %83
  %v85 = vsel %vm66, %v64, 0.0
  %86 = vadd.xlane.f32.xlu0 %v85
  %v87 = vpop.xlane.xlu0 %86
  %v88 = vsel %vm66, %v65, 0.0
  %89 = vadd.xlane.f32.xlu0 %v88
  %v90 = vpop.xlane.xlu0 %89
  %v91 = vrcp.pop 32.0
  %v92 = vmul.f32 32.0, %v91
  %v93 = vsub.f32 1.0, %v92
  %v94 = vmul.f32 %v91, %v93
  %v95 = vadd.f32 %v91, %v94
  %vm96 = vweird.f32 %v91
  %v97 = vsel %vm96, %v91, %v95
  %v98 = vmul.f32 %v69, %v97
  %v99 = vmul.f32 %v72, %v97
  %v100 = vmul.f32 %v75, %v97
  %v101 = vmul.f32 %v78, %v97
  %v102 = vmul.f32 %v81, %v97
  %v103 = vmul.f32 %v84, %v97
  %v104 = vmul.f32 %v87, %v97
  %v105 = vmul.f32 %v90, %v97
  %v106 = vadd.f32 %v98, 1e-05
  %v107 = vadd.f32 %v99, 1e-05
  %v108 = vadd.f32 %v100, 1e-05
  %v109 = vadd.f32 %v101, 1e-05
  %v110 = vadd.f32 %v102, 1e-05
  %v111 = vadd.f32 %v103, 1e-05
  %v112 = vadd.f32 %v104, 1e-05
  %v113 = vadd.f32 %v105, 1e-05
  %v114 = vrsqrt.pop %v106
  %v115 = vmul.f32 %v114, %v106
  %v116 = vmul.f32 %v115, %v114
  %v117 = vmul.f32 0.5, %v116
  %v118 = vsub.f32 1.5, %v117
  %v119 = vmul.f32 %v114, %v118
  %vm120 = vweird.f32 %v106
  %vm121 = vweird.f32 %v114
  %vm122 = vmor %vm120, %vm121
  %v123 = vsel %vm122, %v114, %v119
  %v124 = vrsqrt.pop %v107
  %v125 = vmul.f32 %v124, %v107
  %v126 = vmul.f32 %v125, %v124
  %v127 = vmul.f32 0.5, %v126
  %v128 = vsub.f32 1.5, %v127
  %v129 = vmul.f32 %v124, %v128
  %vm130 = vweird.f32 %v107
  %vm131 = vweird.f32 %v124
  %vm132 = vmor %vm130, %vm131
  %v133 = vsel %vm132, %v124, %v129
  %v134 = vrsqrt.pop %v108
  %v135 = vmul.f32 %v134, %v108
  %v136 = vmul.f32 %v135, %v134
  %v137 = vmul.f32 0.5, %v136
  %v138 = vsub.f32 1.5, %v137
  %v139 = vmul.f32 %v134, %v138
  %vm140 = vweird.f32 %v108
  %vm141 = vweird.f32 %v134
  %vm142 = vmor %vm140, %vm141
  %v143 = vsel %vm142, %v134, %v139
  %v144 = vrsqrt.pop %v109
  %v145 = vmul.f32 %v144, %v109
  %v146 = vmul.f32 %v145, %v144
  %v147 = vmul.f32 0.5, %v146
  %v148 = vsub.f32 1.5, %v147
  %v149 = vmul.f32 %v144, %v148
  %vm150 = vweird.f32 %v109
  %vm151 = vweird.f32 %v144
  %vm152 = vmor %vm150, %vm151
  %v153 = vsel %vm152, %v144, %v149
  %v154 = vrsqrt.pop %v110
  %v155 = vmul.f32 %v154, %v110
  %v156 = vmul.f32 %v155, %v154
  %v157 = vmul.f32 0.5, %v156
  %v158 = vsub.f32 1.5, %v157
  %v159 = vmul.f32 %v154, %v158
  %vm160 = vweird.f32 %v110
  %vm161 = vweird.f32 %v154
  %vm162 = vmor %vm160, %vm161
  %v163 = vsel %vm162, %v154, %v159
  %v164 = vrsqrt.pop %v111
  %v165 = vmul.f32 %v164, %v111
  %v166 = vmul.f32 %v165, %v164
  %v167 = vmul.f32 0.5, %v166
  %v168 = vsub.f32 1.5, %v167
  %v169 = vmul.f32 %v164, %v168
  %vm170 = vweird.f32 %v111
  %vm171 = vweird.f32 %v164
  %vm172 = vmor %vm170, %vm171
  %v173 = vsel %vm172, %v164, %v169
  %v174 = vrsqrt.pop %v112
  %v175 = vmul.f32 %v174, %v112
  %v176 = vmul.f32 %v175, %v174
  %v177 = vmul.f32 0.5, %v176
  %v178 = vsub.f32 1.5, %v177
  %v179 = vmul.f32 %v174, %v178
  %vm180 = vweird.f32 %v112
  %vm181 = vweird.f32 %v174
  %vm182 = vmor %vm180, %vm181
  %v183 = vsel %vm182, %v174, %v179
  %v184 = vrsqrt.pop %v113
  %v185 = vmul.f32 %v184, %v113
  %v186 = vmul.f32 %v185, %v184
  %v187 = vmul.f32 0.5, %v186
  %v188 = vsub.f32 1.5, %v187
  %v189 = vmul.f32 %v184, %v188
  %vm190 = vweird.f32 %v113
  %vm191 = vweird.f32 %v184
  %vm192 = vmor %vm190, %vm191
  %v193 = vsel %vm192, %v184, %v189
  %v194 = vmul.f32 %v50, %v123
  %v195 = vmul.f32 %v51, %v133
  %v196 = vmul.f32 %v52, %v143
  %v197 = vmul.f32 %v53, %v153
  %v198 = vmul.f32 %v54, %v163
  %v199 = vmul.f32 %v55, %v173
  %v200 = vmul.f32 %v56, %v183
  %v201 = vmul.f32 %v57, %v193
  %v202 = vld [vmem:[%s2] sm:$0x1]
  %v204 = vperm.slane %v202, 0
  %v206 = vmul.f32 %v194, %v204
  %v207 = vmul.f32 %v195, %v204
  %v208 = vmul.f32 %v196, %v204
  %v209 = vmul.f32 %v197, %v204
  %v210 = vmul.f32 %v198, %v204
  %v211 = vmul.f32 %v199, %v204
  %v212 = vmul.f32 %v200, %v204
  %v213 = vmul.f32 %v201, %v204
  %v214 = vld [vmem:[%s3] sm:$0xff]
  %v215 = vld [vmem:[%s3 + $0x8] sm:$0xff]
  %v216 = vld [vmem:[%s3 + $0x10] sm:$0xff]
  %v217 = vld [vmem:[%s3 + $0x18] sm:$0xff]
  %v219 = vsel %vm66, %v206, 0
  %v222 = vsel %vm66, %v207, 0
  %v225 = vsel %vm66, %v208, 0
  %v228 = vsel %vm66, %v209, 0
  %v231 = vsel %vm66, %v210, 0
  %v234 = vsel %vm66, %v211, 0
  %v237 = vsel %vm66, %v212, 0
  %v240 = vsel %vm66, %v213, 0
  %242 = vmatpush.msra.mxu0 0.0
  %243 = vmatpush.msra.mxu0 0.0
  %244 = vmatpush.msra.mxu0 0.0
  %245 = vmatpush.msra.mxu0 0.0
  %246 = vmatpush.msra.mxu0 0.0
  %247 = vmatpush.msra.mxu0 0.0
  %248 = vmatpush.msra.mxu0 0.0
  %249 = vmatpush.msra.mxu0 0.0
  %250 = vmatpush.msra.mxu0 0.0
  %251 = vmatpush.msra.mxu0 0.0
  %252 = vmatpush.msra.mxu0 0.0
  %253 = vmatpush.msra.mxu0 0.0
  %254 = vmatpush.msra.mxu0 %v217
  %255 = vmatpush.msra.mxu0 %v216
  %256 = vmatpush.msra.mxu0 %v215
  %257 = vmatpush.msra.mxu0 %v214
  %258 = vmatmul.f32.gmra.mxu0 %v219
  %v259 = vpop.f32.mrf.mxu0
  %v260 = vadd.f32 0.0, %v259
  %261 = vmatmul.f32.gmra.mxu0 %v222
  %v262 = vpop.f32.mrf.mxu0
  %v263 = vadd.f32 0.0, %v262
  %264 = vmatmul.f32.gmra.mxu0 %v225
  %v265 = vpop.f32.mrf.mxu0
  %v266 = vadd.f32 0.0, %v265
  %267 = vmatmul.f32.gmra.mxu0 %v228
  %v268 = vpop.f32.mrf.mxu0
  %v269 = vadd.f32 0.0, %v268
  %270 = vmatmul.f32.gmra.mxu0 %v231
  %v271 = vpop.f32.mrf.mxu0
  %v272 = vadd.f32 0.0, %v271
  %273 = vmatmul.f32.gmra.mxu0 %v234
  %v274 = vpop.f32.mrf.mxu0
  %v275 = vadd.f32 0.0, %v274
  %276 = vmatmul.f32.gmra.mxu0 %v237
  %v277 = vpop.f32.mrf.mxu0
  %v278 = vadd.f32 0.0, %v277
  %279 = vmatmul.f32.gmra.mxu0 %v240
  %v280 = vpop.f32.mrf.mxu0
  %v281 = vadd.f32 0.0, %v280
  %282 = vdwg.mxu0
  %v283 = vld [vmem:[%s4] sm:$0xff]
  %v284 = vld [vmem:[%s4 + $0x8] sm:$0xff]
  %v285 = vld [vmem:[%s4 + $0x10] sm:$0xff]
  %v286 = vld [vmem:[%s4 + $0x18] sm:$0xff]
  %287 = vmatpush.msra.mxu0 0.0
  %288 = vmatpush.msra.mxu0 0.0
  %289 = vmatpush.msra.mxu0 0.0
  %290 = vmatpush.msra.mxu0 0.0
  %291 = vmatpush.msra.mxu0 0.0
  %292 = vmatpush.msra.mxu0 0.0
  %293 = vmatpush.msra.mxu0 0.0
  %294 = vmatpush.msra.mxu0 0.0
  %295 = vmatpush.msra.mxu0 0.0
  %296 = vmatpush.msra.mxu0 0.0
  %297 = vmatpush.msra.mxu0 0.0
  %298 = vmatpush.msra.mxu0 0.0
  %299 = vmatpush.msra.mxu0 %v286
  %300 = vmatpush.msra.mxu0 %v285
  %301 = vmatpush.msra.mxu0 %v284
  %302 = vmatpush.msra.mxu0 %v283
  %303 = vmatmul.f32.gmra.mxu0 %v219
  %v304 = vpop.f32.mrf.mxu0
  %v305 = vadd.f32 0.0, %v304
  %306 = vmatmul.f32.gmra.mxu0 %v222
  %v307 = vpop.f32.mrf.mxu0
  %v308 = vadd.f32 0.0, %v307
  %309 = vmatmul.f32.gmra.mxu0 %v225
  %v310 = vpop.f32.mrf.mxu0
  %v311 = vadd.f32 0.0, %v310
  %312 = vmatmul.f32.gmra.mxu0 %v228
  %v313 = vpop.f32.mrf.mxu0
  %v314 = vadd.f32 0.0, %v313
  %315 = vmatmul.f32.gmra.mxu0 %v231
  %v316 = vpop.f32.mrf.mxu0
  %v317 = vadd.f32 0.0, %v316
  %318 = vmatmul.f32.gmra.mxu0 %v234
  %v319 = vpop.f32.mrf.mxu0
  %v320 = vadd.f32 0.0, %v319
  %321 = vmatmul.f32.gmra.mxu0 %v237
  %v322 = vpop.f32.mrf.mxu0
  %v323 = vadd.f32 0.0, %v322
  %324 = vmatmul.f32.gmra.mxu0 %v240
  %v325 = vpop.f32.mrf.mxu0
  %v326 = vadd.f32 0.0, %v325
  %327 = vdwg.mxu0
  %v328 = vld [vmem:[%s6] sm:$0x1]
  %v329 = vld [vmem:[%s5 + $0x3] sm:$0x1]
  %v330 = vperm.slane %v329, 0
  %v331 = vmul.f32 %v260, %v330
  %v332 = vmul.f32 %v263, %v330
  %v333 = vmul.f32 %v266, %v330
  %v334 = vmul.f32 %v269, %v330
  %v335 = vmul.f32 %v272, %v330
  %v336 = vmul.f32 %v275, %v330
  %v337 = vmul.f32 %v278, %v330
  %v338 = vmul.f32 %v281, %v330
  %v340 = vperm.slane %v328, 0
  %v342 = vadd.f32 %v340, %v331
  %v343 = vadd.f32 %v340, %v332
  %v344 = vadd.f32 %v340, %v333
  %v345 = vadd.f32 %v340, %v334
  %v346 = vadd.f32 %v340, %v335
  %v347 = vadd.f32 %v340, %v336
  %v348 = vadd.f32 %v340, %v337
  %v349 = vadd.f32 %v340, %v338
  %v350 = vld [vmem:[%s5] sm:$0x1]
  %v351 = vperm.slane %v350, 0
  %v352 = vmul.f32 %v351, 0.0
  %v353 = vmul.f32 %v260, %v351
  %v354 = vmul.f32 %v263, %v351
  %v355 = vmul.f32 %v266, %v351
  %v356 = vmul.f32 %v269, %v351
  %v357 = vmul.f32 %v272, %v351
  %v358 = vadd.f32 %v342, %v352
  %v359 = vadd.f32 %v343, %v352
  %v360 = vadd.f32 %v344, %v352
  %v361 = vadd.f32 %v345, %v353
  %v362 = vadd.f32 %v346, %v354
  %v363 = vadd.f32 %v347, %v355
  %v364 = vadd.f32 %v348, %v356
  %v365 = vadd.f32 %v349, %v357
  %v366 = vld [vmem:[%s5 + $0x1] sm:$0x1]
  %v367 = vperm.slane %v366, 0
  %v368 = vmul.f32 %v367, 0.0
  %v369 = vmul.f32 %v260, %v367
  %v370 = vmul.f32 %v263, %v367
  %v371 = vmul.f32 %v266, %v367
  %v372 = vmul.f32 %v269, %v367
  %v373 = vmul.f32 %v272, %v367
  %v374 = vmul.f32 %v275, %v367
  %v375 = vadd.f32 %v358, %v368
  %v376 = vadd.f32 %v359, %v368
  %v377 = vadd.f32 %v360, %v369
  %v378 = vadd.f32 %v361, %v370
  %v379 = vadd.f32 %v362, %v371
  %v380 = vadd.f32 %v363, %v372
  %v381 = vadd.f32 %v364, %v373
  %v382 = vadd.f32 %v365, %v374
  %v383 = vld [vmem:[%s5 + $0x2] sm:$0x1]
  %v384 = vperm.slane %v383, 0
  %v385 = vmul.f32 %v384, 0.0
  %v386 = vmul.f32 %v260, %v384
  %v387 = vmul.f32 %v263, %v384
  %v388 = vmul.f32 %v266, %v384
  %v389 = vmul.f32 %v269, %v384
  %v390 = vmul.f32 %v272, %v384
  %v391 = vmul.f32 %v275, %v384
  %v392 = vmul.f32 %v278, %v384
  %v393 = vadd.f32 %v375, %v385
  %v394 = vadd.f32 %v376, %v386
  %v395 = vadd.f32 %v377, %v387
  %v396 = vadd.f32 %v378, %v388
  %v397 = vadd.f32 %v379, %v389
  %v398 = vadd.f32 %v380, %v390
  %v399 = vadd.f32 %v381, %v391
  %v400 = vadd.f32 %v382, %v392
  %v401 = vand.u32 2147483647, %v393
  %v402 = vand.u32 2147483647, %v394
  %v403 = vand.u32 2147483647, %v395
  %v404 = vand.u32 2147483647, %v396
  %v405 = vand.u32 2147483647, %v397
  %v406 = vand.u32 2147483647, %v398
  %v407 = vand.u32 2147483647, %v399
  %v408 = vand.u32 2147483647, %v400
  %v409 = vsub.f32 0.0, %v401
  %v410 = vsub.f32 0.0, %v402
  %v411 = vsub.f32 0.0, %v403
  %v412 = vsub.f32 0.0, %v404
  %v413 = vsub.f32 0.0, %v405
  %v414 = vsub.f32 0.0, %v406
  %v415 = vsub.f32 0.0, %v407
  %v416 = vsub.f32 0.0, %v408
  %v417 = vmul.f32 %v409, 1.442695
  %v418 = vpow.pop %v417
  %v419 = vmul.f32 %v410, 1.442695
  %v420 = vpow.pop %v419
  %v421 = vmul.f32 %v411, 1.442695
  %v422 = vpow.pop %v421
  %v423 = vmul.f32 %v412, 1.442695
  %v424 = vpow.pop %v423
  %v425 = vmul.f32 %v413, 1.442695
  %v426 = vpow.pop %v425
  %v427 = vmul.f32 %v414, 1.442695
  %v428 = vpow.pop %v427
  %v429 = vmul.f32 %v415, 1.442695
  %v430 = vpow.pop %v429
  %v431 = vmul.f32 %v416, 1.442695
  %v432 = vpow.pop %v431
  %vm433 = vcmp.ge.f32.partialorder %v393, 0.0
  %vm434 = vcmp.ge.f32.partialorder %v394, 0.0
  %vm435 = vcmp.ge.f32.partialorder %v395, 0.0
  %vm436 = vcmp.ge.f32.partialorder %v396, 0.0
  %vm437 = vcmp.ge.f32.partialorder %v397, 0.0
  %vm438 = vcmp.ge.f32.partialorder %v398, 0.0
  %vm439 = vcmp.ge.f32.partialorder %v399, 0.0
  %vm440 = vcmp.ge.f32.partialorder %v400, 0.0
  %v441 = vadd.f32 %v418, 1.0
  %v442 = vadd.f32 %v420, 1.0
  %v443 = vadd.f32 %v422, 1.0
  %v444 = vadd.f32 %v424, 1.0
  %v445 = vadd.f32 %v426, 1.0
  %v446 = vadd.f32 %v428, 1.0
  %v447 = vadd.f32 %v430, 1.0
  %v448 = vadd.f32 %v432, 1.0
  %v449 = vrcp.pop %v441
  %v450 = vmul.f32 %v441, %v449
  %v451 = vsub.f32 1.0, %v450
  %v452 = vmul.f32 %v449, %v451
  %v453 = vadd.f32 %v449, %v452
  %vm454 = vweird.f32 %v441
  %vm455 = vweird.f32 %v449
  %vm456 = vmor %vm454, %vm455
  %v457 = vsel %vm456, %v449, %v453
  %v458 = vand.u32 2147483647, %v441
  %vm459 = vcmp.eq.f32.partialorder %v458, 8.507059e+37
  %v460 = vand.u32 %v441, 2147483648
  %v461 = vor.u32 1.1754944e-38, %v460
  %v462 = vsel %vm459, %v461, %v457
  %v463 = vmul.f32 1.0, %v462
  %v464 = vrcp.pop %v442
  %v465 = vmul.f32 %v442, %v464
  %v466 = vsub.f32 1.0, %v465
  %v467 = vmul.f32 %v464, %v466
  %v468 = vadd.f32 %v464, %v467
  %vm469 = vweird.f32 %v442
  %vm470 = vweird.f32 %v464
  %vm471 = vmor %vm469, %vm470
  %v472 = vsel %vm471, %v464, %v468
  %v473 = vand.u32 2147483647, %v442
  %vm474 = vcmp.eq.f32.partialorder %v473, 8.507059e+37
  %v475 = vand.u32 %v442, 2147483648
  %v476 = vor.u32 1.1754944e-38, %v475
  %v477 = vsel %vm474, %v476, %v472
  %v478 = vmul.f32 1.0, %v477
  %v479 = vrcp.pop %v443
  %v480 = vmul.f32 %v443, %v479
  %v481 = vsub.f32 1.0, %v480
  %v482 = vmul.f32 %v479, %v481
  %v483 = vadd.f32 %v479, %v482
  %vm484 = vweird.f32 %v443
  %vm485 = vweird.f32 %v479
  %vm486 = vmor %vm484, %vm485
  %v487 = vsel %vm486, %v479, %v483
  %v488 = vand.u32 2147483647, %v443
  %vm489 = vcmp.eq.f32.partialorder %v488, 8.507059e+37
  %v490 = vand.u32 %v443, 2147483648
  %v491 = vor.u32 1.1754944e-38, %v490
  %v492 = vsel %vm489, %v491, %v487
  %v493 = vmul.f32 1.0, %v492
  %v494 = vrcp.pop %v444
  %v495 = vmul.f32 %v444, %v494
  %v496 = vsub.f32 1.0, %v495
  %v497 = vmul.f32 %v494, %v496
  %v498 = vadd.f32 %v494, %v497
  %vm499 = vweird.f32 %v444
  %vm500 = vweird.f32 %v494
  %vm501 = vmor %vm499, %vm500
  %v502 = vsel %vm501, %v494, %v498
  %v503 = vand.u32 2147483647, %v444
  %vm504 = vcmp.eq.f32.partialorder %v503, 8.507059e+37
  %v505 = vand.u32 %v444, 2147483648
  %v506 = vor.u32 1.1754944e-38, %v505
  %v507 = vsel %vm504, %v506, %v502
  %v508 = vmul.f32 1.0, %v507
  %v509 = vrcp.pop %v445
  %v510 = vmul.f32 %v445, %v509
  %v511 = vsub.f32 1.0, %v510
  %v512 = vmul.f32 %v509, %v511
  %v513 = vadd.f32 %v509, %v512
  %vm514 = vweird.f32 %v445
  %vm515 = vweird.f32 %v509
  %vm516 = vmor %vm514, %vm515
  %v517 = vsel %vm516, %v509, %v513
  %v518 = vand.u32 2147483647, %v445
  %vm519 = vcmp.eq.f32.partialorder %v518, 8.507059e+37
  %v520 = vand.u32 %v445, 2147483648
  %v521 = vor.u32 1.1754944e-38, %v520
  %v522 = vsel %vm519, %v521, %v517
  %v523 = vmul.f32 1.0, %v522
  %v524 = vrcp.pop %v446
  %v525 = vmul.f32 %v446, %v524
  %v526 = vsub.f32 1.0, %v525
  %v527 = vmul.f32 %v524, %v526
  %v528 = vadd.f32 %v524, %v527
  %vm529 = vweird.f32 %v446
  %vm530 = vweird.f32 %v524
  %vm531 = vmor %vm529, %vm530
  %v532 = vsel %vm531, %v524, %v528
  %v533 = vand.u32 2147483647, %v446
  %vm534 = vcmp.eq.f32.partialorder %v533, 8.507059e+37
  %v535 = vand.u32 %v446, 2147483648
  %v536 = vor.u32 1.1754944e-38, %v535
  %v537 = vsel %vm534, %v536, %v532
  %v538 = vmul.f32 1.0, %v537
  %v539 = vrcp.pop %v447
  %v540 = vmul.f32 %v447, %v539
  %v541 = vsub.f32 1.0, %v540
  %v542 = vmul.f32 %v539, %v541
  %v543 = vadd.f32 %v539, %v542
  %vm544 = vweird.f32 %v447
  %vm545 = vweird.f32 %v539
  %vm546 = vmor %vm544, %vm545
  %v547 = vsel %vm546, %v539, %v543
  %v548 = vand.u32 2147483647, %v447
  %vm549 = vcmp.eq.f32.partialorder %v548, 8.507059e+37
  %v550 = vand.u32 %v447, 2147483648
  %v551 = vor.u32 1.1754944e-38, %v550
  %v552 = vsel %vm549, %v551, %v547
  %v553 = vmul.f32 1.0, %v552
  %v554 = vrcp.pop %v448
  %v555 = vmul.f32 %v448, %v554
  %v556 = vsub.f32 1.0, %v555
  %v557 = vmul.f32 %v554, %v556
  %v558 = vadd.f32 %v554, %v557
  %vm559 = vweird.f32 %v448
  %vm560 = vweird.f32 %v554
  %vm561 = vmor %vm559, %vm560
  %v562 = vsel %vm561, %v554, %v558
  %v563 = vand.u32 2147483647, %v448
  %vm564 = vcmp.eq.f32.partialorder %v563, 8.507059e+37
  %v565 = vand.u32 %v448, 2147483648
  %v566 = vor.u32 1.1754944e-38, %v565
  %v567 = vsel %vm564, %v566, %v562
  %v568 = vmul.f32 1.0, %v567
  %v569 = vmul.f32 %v418, %v462
  %v570 = vmul.f32 %v420, %v477
  %v571 = vmul.f32 %v422, %v492
  %v572 = vmul.f32 %v424, %v507
  %v573 = vmul.f32 %v426, %v522
  %v574 = vmul.f32 %v428, %v537
  %v575 = vmul.f32 %v430, %v552
  %v576 = vmul.f32 %v432, %v567
  %v577 = vsel %vm433, %v463, %v569
  %v578 = vsel %vm434, %v478, %v570
  %v579 = vsel %vm435, %v493, %v571
  %v580 = vsel %vm436, %v508, %v572
  %v581 = vsel %vm437, %v523, %v573
  %v582 = vsel %vm438, %v538, %v574
  %v583 = vsel %vm439, %v553, %v575
  %v584 = vsel %vm440, %v568, %v576
  %v585 = vmul.f32 %v393, %v577
  %v586 = vmul.f32 %v394, %v578
  %v587 = vmul.f32 %v395, %v579
  %v588 = vmul.f32 %v396, %v580
  %v589 = vmul.f32 %v397, %v581
  %v590 = vmul.f32 %v398, %v582
  %v591 = vmul.f32 %v399, %v583
  %v592 = vmul.f32 %v400, %v584
  %v593 = vld [vmem:[%s7] sm:$0xff]
  %v594 = vld [vmem:[%s7 + $0x8] sm:$0xff]
  %v595 = vld [vmem:[%s7 + $0x10] sm:$0xff]
  %v596 = vld [vmem:[%s7 + $0x18] sm:$0xff]
  %v598 = vsel %vm66, %v585, 0
  %v601 = vsel %vm66, %v586, 0
  %v604 = vsel %vm66, %v587, 0
  %v607 = vsel %vm66, %v588, 0
  %v610 = vsel %vm66, %v589, 0
  %v613 = vsel %vm66, %v590, 0
  %v616 = vsel %vm66, %v591, 0
  %v619 = vsel %vm66, %v592, 0
  %621 = vmatpush.msra.mxu0 0.0
  %622 = vmatpush.msra.mxu0 0.0
  %623 = vmatpush.msra.mxu0 0.0
  %624 = vmatpush.msra.mxu0 0.0
  %625 = vmatpush.msra.mxu0 0.0
  %626 = vmatpush.msra.mxu0 0.0
  %627 = vmatpush.msra.mxu0 0.0
  %628 = vmatpush.msra.mxu0 0.0
  %629 = vmatpush.msra.mxu0 0.0
  %630 = vmatpush.msra.mxu0 0.0
  %631 = vmatpush.msra.mxu0 0.0
  %632 = vmatpush.msra.mxu0 0.0
  %633 = vmatpush.msra.mxu0 %v596
  %634 = vmatpush.msra.mxu0 %v595
  %635 = vmatpush.msra.mxu0 %v594
  %636 = vmatpush.msra.mxu0 %v593
  %637 = vmatmul.f32.gmra.mxu0 %v598
  %v638 = vpop.f32.mrf.mxu0
  %v639 = vadd.f32 0.0, %v638
  %640 = vmatmul.f32.gmra.mxu0 %v601
  %v641 = vpop.f32.mrf.mxu0
  %v642 = vadd.f32 0.0, %v641
  %643 = vmatmul.f32.gmra.mxu0 %v604
  %v644 = vpop.f32.mrf.mxu0
  %v645 = vadd.f32 0.0, %v644
  %646 = vmatmul.f32.gmra.mxu0 %v607
  %v647 = vpop.f32.mrf.mxu0
  %v648 = vadd.f32 0.0, %v647
  %649 = vmatmul.f32.gmra.mxu0 %v610
  %v650 = vpop.f32.mrf.mxu0
  %v651 = vadd.f32 0.0, %v650
  %652 = vmatmul.f32.gmra.mxu0 %v613
  %v653 = vpop.f32.mrf.mxu0
  %v654 = vadd.f32 0.0, %v653
  %655 = vmatmul.f32.gmra.mxu0 %v616
  %v656 = vpop.f32.mrf.mxu0
  %v657 = vadd.f32 0.0, %v656
  %658 = vmatmul.f32.gmra.mxu0 %v619
  %v659 = vpop.f32.mrf.mxu0
  %v660 = vadd.f32 0.0, %v659
  %661 = vdwg.mxu0
  %v662 = vld [vmem:[%s8] sm:$0xff]
  %v663 = vld [vmem:[%s8 + $0x8] sm:$0xff]
  %v664 = vld [vmem:[%s8 + $0x10] sm:$0xff]
  %v665 = vld [vmem:[%s8 + $0x18] sm:$0xff]
  %666 = vmatpush.msra.mxu0 0.0
  %667 = vmatpush.msra.mxu0 0.0
  %668 = vmatpush.msra.mxu0 0.0
  %669 = vmatpush.msra.mxu0 0.0
  %670 = vmatpush.msra.mxu0 0.0
  %671 = vmatpush.msra.mxu0 0.0
  %672 = vmatpush.msra.mxu0 0.0
  %673 = vmatpush.msra.mxu0 0.0
  %674 = vmatpush.msra.mxu0 0.0
  %675 = vmatpush.msra.mxu0 0.0
  %676 = vmatpush.msra.mxu0 0.0
  %677 = vmatpush.msra.mxu0 0.0
  %678 = vmatpush.msra.mxu0 %v665
  %679 = vmatpush.msra.mxu0 %v664
  %680 = vmatpush.msra.mxu0 %v663
  %681 = vmatpush.msra.mxu0 %v662
  %682 = vmatmul.f32.gmra.mxu0 %v598
  %v683 = vpop.f32.mrf.mxu0
  %v684 = vadd.f32 0.0, %v683
  %685 = vmatmul.f32.gmra.mxu0 %v601
  %v686 = vpop.f32.mrf.mxu0
  %v687 = vadd.f32 0.0, %v686
  %688 = vmatmul.f32.gmra.mxu0 %v604
  %v689 = vpop.f32.mrf.mxu0
  %v690 = vadd.f32 0.0, %v689
  %691 = vmatmul.f32.gmra.mxu0 %v607
  %v692 = vpop.f32.mrf.mxu0
  %v693 = vadd.f32 0.0, %v692
  %694 = vmatmul.f32.gmra.mxu0 %v610
  %v695 = vpop.f32.mrf.mxu0
  %v696 = vadd.f32 0.0, %v695
  %697 = vmatmul.f32.gmra.mxu0 %v613
  %v698 = vpop.f32.mrf.mxu0
  %v699 = vadd.f32 0.0, %v698
  %700 = vmatmul.f32.gmra.mxu0 %v616
  %v701 = vpop.f32.mrf.mxu0
  %v702 = vadd.f32 0.0, %v701
  %703 = vmatmul.f32.gmra.mxu0 %v619
  %v704 = vpop.f32.mrf.mxu0
  %v705 = vadd.f32 0.0, %v704
  %706 = vdwg.mxu0
  %v707 = vld [vmem:[%s9] sm:$0xff]
  %v708 = vld [vmem:[%s9 + $0x8] sm:$0xff]
  %v709 = vld [vmem:[%s9 + $0x10] sm:$0xff]
  %v710 = vld [vmem:[%s9 + $0x18] sm:$0xff]
  %711 = vmatpush.msra.mxu0 0.0
  %712 = vmatpush.msra.mxu0 0.0
  %713 = vmatpush.msra.mxu0 0.0
  %714 = vmatpush.msra.mxu0 0.0
  %715 = vmatpush.msra.mxu0 0.0
  %716 = vmatpush.msra.mxu0 0.0
  %717 = vmatpush.msra.mxu0 0.0
  %718 = vmatpush.msra.mxu0 0.0
  %719 = vmatpush.msra.mxu0 0.0
  %720 = vmatpush.msra.mxu0 0.0
  %721 = vmatpush.msra.mxu0 0.0
  %722 = vmatpush.msra.mxu0 0.0
  %723 = vmatpush.msra.mxu0 %v710
  %724 = vmatpush.msra.mxu0 %v709
  %725 = vmatpush.msra.mxu0 %v708
  %726 = vmatpush.msra.mxu0 %v707
  %727 = vmatmul.f32.gmra.mxu0 %v598
  %v728 = vpop.f32.mrf.mxu0
  %v729 = vadd.f32 0.0, %v728
  %730 = vmatmul.f32.gmra.mxu0 %v601
  %v731 = vpop.f32.mrf.mxu0
  %v732 = vadd.f32 0.0, %v731
  %733 = vmatmul.f32.gmra.mxu0 %v604
  %v734 = vpop.f32.mrf.mxu0
  %v735 = vadd.f32 0.0, %v734
  %736 = vmatmul.f32.gmra.mxu0 %v607
  %v737 = vpop.f32.mrf.mxu0
  %v738 = vadd.f32 0.0, %v737
  %739 = vmatmul.f32.gmra.mxu0 %v610
  %v740 = vpop.f32.mrf.mxu0
  %v741 = vadd.f32 0.0, %v740
  %742 = vmatmul.f32.gmra.mxu0 %v613
  %v743 = vpop.f32.mrf.mxu0
  %v744 = vadd.f32 0.0, %v743
  %745 = vmatmul.f32.gmra.mxu0 %v616
  %v746 = vpop.f32.mrf.mxu0
  %v747 = vadd.f32 0.0, %v746
  %748 = vmatmul.f32.gmra.mxu0 %v619
  %v749 = vpop.f32.mrf.mxu0
  %v750 = vadd.f32 0.0, %v749
  %751 = vdwg.mxu0
  %v752 = vld [vmem:[%s10] sm:$0x3]
  %v753 = vld [vmem:[%s11] sm:$0x1]
  %v755 = vperm.slane %v753, 0
  %vm757 = vcmask 15360
  %v759 = vsel %vm757, %v639, 0
  %v762 = vsel %vm757, %v642, 0
  %v765 = vsel %vm757, %v645, 0
  %v768 = vsel %vm757, %v648, 0
  %v771 = vsel %vm757, %v651, 0
  %v774 = vsel %vm757, %v654, 0
  %v777 = vsel %vm757, %v657, 0
  %v780 = vsel %vm757, %v660, 0
  %vm782 = vcmask 1041408
  %v784 = vsel %vm782, %v752, 0
  %786 = vmatpush.msra.mxu0 0.0
  %787 = vmatpush.msra.mxu0 0.0
  %788 = vmatpush.msra.mxu0 0.0
  %789 = vmatpush.msra.mxu0 0.0
  %790 = vmatpush.msra.mxu0 0.0
  %791 = vmatpush.msra.mxu0 0.0
  %792 = vmatpush.msra.mxu0 0.0
  %793 = vmatpush.msra.mxu0 0.0
  %794 = vmatpush.msra.mxu0 0.0
  %795 = vmatpush.msra.mxu0 0.0
  %796 = vmatpush.msra.mxu0 0.0
  %797 = vmatpush.msra.mxu0 0.0
  %798 = vmatpush.msra.mxu0 0.0
  %799 = vmatpush.msra.mxu0 0.0
  %800 = vmatpush.msra.mxu0 0.0
  %801 = vmatpush.msra.mxu0 %v784
  %802 = vmatmul.f32.gmra.mxu0 %v759
  %v803 = vpop.f32.mrf.mxu0
  %v804 = vadd.f32 %v755, %v803
  %805 = vmatmul.f32.gmra.mxu0 %v762
  %v806 = vpop.f32.mrf.mxu0
  %v807 = vadd.f32 %v755, %v806
  %808 = vmatmul.f32.gmra.mxu0 %v765
  %v809 = vpop.f32.mrf.mxu0
  %v810 = vadd.f32 %v755, %v809
  %811 = vmatmul.f32.gmra.mxu0 %v768
  %v812 = vpop.f32.mrf.mxu0
  %v813 = vadd.f32 %v755, %v812
  %814 = vmatmul.f32.gmra.mxu0 %v771
  %v815 = vpop.f32.mrf.mxu0
  %v816 = vadd.f32 %v755, %v815
  %817 = vmatmul.f32.gmra.mxu0 %v774
  %v818 = vpop.f32.mrf.mxu0
  %v819 = vadd.f32 %v755, %v818
  %820 = vmatmul.f32.gmra.mxu0 %v777
  %v821 = vpop.f32.mrf.mxu0
  %v822 = vadd.f32 %v755, %v821
  %823 = vmatmul.f32.gmra.mxu0 %v780
  %v824 = vpop.f32.mrf.mxu0
  %v825 = vadd.f32 %v755, %v824
  %826 = vdwg.mxu0
  %v827 = vmax.f32 %v804, 0.0
  %v828 = vmax.f32 %v807, 0.0
  %v829 = vmax.f32 %v810, 0.0
  %v830 = vmax.f32 %v813, 0.0
  %v831 = vmax.f32 %v816, 0.0
  %v832 = vmax.f32 %v819, 0.0
  %v833 = vmax.f32 %v822, 0.0
  %v834 = vmax.f32 %v825, 0.0
  %v835 = vand.u32 2147483647, %v804
  %v836 = vand.u32 2147483647, %v807
  %v837 = vand.u32 2147483647, %v810
  %v838 = vand.u32 2147483647, %v813
  %v839 = vand.u32 2147483647, %v816
  %v840 = vand.u32 2147483647, %v819
  %v841 = vand.u32 2147483647, %v822
  %v842 = vand.u32 2147483647, %v825
  %v843 = vsub.f32 0.0, %v835
  %v844 = vsub.f32 0.0, %v836
  %v845 = vsub.f32 0.0, %v837
  %v846 = vsub.f32 0.0, %v838
  %v847 = vsub.f32 0.0, %v839
  %v848 = vsub.f32 0.0, %v840
  %v849 = vsub.f32 0.0, %v841
  %v850 = vsub.f32 0.0, %v842
  %v851 = vmul.f32 %v843, 1.442695
  %v852 = vpow.pop %v851
  %v853 = vmul.f32 %v844, 1.442695
  %v854 = vpow.pop %v853
  %v855 = vmul.f32 %v845, 1.442695
  %v856 = vpow.pop %v855
  %v857 = vmul.f32 %v846, 1.442695
  %v858 = vpow.pop %v857
  %v859 = vmul.f32 %v847, 1.442695
  %v860 = vpow.pop %v859
  %v861 = vmul.f32 %v848, 1.442695
  %v862 = vpow.pop %v861
  %v863 = vmul.f32 %v849, 1.442695
  %v864 = vpow.pop %v863
  %v865 = vmul.f32 %v850, 1.442695
  %v866 = vpow.pop %v865
  %v867 = vadd.f32 %v852, 1.0
  %v868 = vadd.f32 %v854, 1.0
  %v869 = vadd.f32 %v856, 1.0
  %v870 = vadd.f32 %v858, 1.0
  %v871 = vadd.f32 %v860, 1.0
  %v872 = vadd.f32 %v862, 1.0
  %v873 = vadd.f32 %v864, 1.0
  %v874 = vadd.f32 %v866, 1.0
  %v875 = vlog2.pop %v867
  %v876 = vmul.f32 %v875, 0.6931472
  %v877 = vlog2.pop %v868
  %v878 = vmul.f32 %v877, 0.6931472
  %v879 = vlog2.pop %v869
  %v880 = vmul.f32 %v879, 0.6931472
  %v881 = vlog2.pop %v870
  %v882 = vmul.f32 %v881, 0.6931472
  %v883 = vlog2.pop %v871
  %v884 = vmul.f32 %v883, 0.6931472
  %v885 = vlog2.pop %v872
  %v886 = vmul.f32 %v885, 0.6931472
  %v887 = vlog2.pop %v873
  %v888 = vmul.f32 %v887, 0.6931472
  %v889 = vlog2.pop %v874
  %v890 = vmul.f32 %v889, 0.6931472
  %v891 = vadd.f32 %v827, %v876
  %v892 = vadd.f32 %v828, %v878
  %v893 = vadd.f32 %v829, %v880
  %v894 = vadd.f32 %v830, %v882
  %v895 = vadd.f32 %v831, %v884
  %v896 = vadd.f32 %v832, %v886
  %v897 = vadd.f32 %v833, %v888
  %v898 = vadd.f32 %v834, %v890
  %v899 = vld [vmem:[%s13] sm:$0x1]
  %v901 = vperm.slane %v899, 0
  %v903 = vmul.f32 %v585, %v901
  %v904 = vmul.f32 %v586, %v901
  %v905 = vmul.f32 %v587, %v901
  %v906 = vmul.f32 %v588, %v901
  %v907 = vmul.f32 %v589, %v901
  %v908 = vmul.f32 %v590, %v901
  %v909 = vmul.f32 %v591, %v901
  %v910 = vmul.f32 %v592, %v901
  %v911 = vld [vmem:[%s12] sm:$0x1]
  %v912 = vperm.slane %v911, 0
  %v913 = vmul.f32 %v891, %v912
  %v914 = vmul.f32 %v892, %v912
  %v915 = vmul.f32 %v893, %v912
  %v916 = vmul.f32 %v894, %v912
  %v917 = vmul.f32 %v895, %v912
  %v918 = vmul.f32 %v896, %v912
  %v919 = vmul.f32 %v897, %v912
  %v920 = vmul.f32 %v898, %v912
  %v921 = vmul.f32 %v913, 1.442695
  %v922 = vpow.pop %v921
  %v923 = vmul.f32 %v914, 1.442695
  %v924 = vpow.pop %v923
  %v925 = vmul.f32 %v915, 1.442695
  %v926 = vpow.pop %v925
  %v927 = vmul.f32 %v916, 1.442695
  %v928 = vpow.pop %v927
  %v929 = vmul.f32 %v917, 1.442695
  %v930 = vpow.pop %v929
  %v931 = vmul.f32 %v918, 1.442695
  %v932 = vpow.pop %v931
  %v933 = vmul.f32 %v919, 1.442695
  %v934 = vpow.pop %v933
  %v935 = vmul.f32 %v920, 1.442695
  %v936 = vpow.pop %v935
  %v937 = vld [vmem:[%s12 + $0x1] sm:$0x1]
  %v938 = vperm.slane %v937, 0
  %v939 = vmul.f32 %v891, %v938
  %v940 = vmul.f32 %v892, %v938
  %v941 = vmul.f32 %v893, %v938
  %v942 = vmul.f32 %v894, %v938
  %v943 = vmul.f32 %v895, %v938
  %v944 = vmul.f32 %v896, %v938
  %v945 = vmul.f32 %v897, %v938
  %v946 = vmul.f32 %v898, %v938
  %v947 = vmul.f32 %v939, 1.442695
  %v948 = vpow.pop %v947
  %v949 = vmul.f32 %v940, 1.442695
  %v950 = vpow.pop %v949
  %v951 = vmul.f32 %v941, 1.442695
  %v952 = vpow.pop %v951
  %v953 = vmul.f32 %v942, 1.442695
  %v954 = vpow.pop %v953
  %v955 = vmul.f32 %v943, 1.442695
  %v956 = vpow.pop %v955
  %v957 = vmul.f32 %v944, 1.442695
  %v958 = vpow.pop %v957
  %v959 = vmul.f32 %v945, 1.442695
  %v960 = vpow.pop %v959
  %v961 = vmul.f32 %v946, 1.442695
  %v962 = vpow.pop %v961
  %964 = vset.pattern.permute.xlu0 0
  %965 = vperm.xlu0 %964, %v684
  %v966 = vpop.permute.xlu0 %965
  %969 = vset.pattern.permute.xlu0 0
  %970 = vperm.xlu0 %969, %v687
  %v971 = vpop.permute.xlu0 %970
  %974 = vset.pattern.permute.xlu0 0
  %975 = vperm.xlu0 %974, %v690
  %v976 = vpop.permute.xlu0 %975
  %979 = vset.pattern.permute.xlu0 0
  %980 = vperm.xlu0 %979, %v693
  %v981 = vpop.permute.xlu0 %980
  %984 = vset.pattern.permute.xlu0 0
  %985 = vperm.xlu0 %984, %v696
  %v986 = vpop.permute.xlu0 %985
  %989 = vset.pattern.permute.xlu0 0
  %990 = vperm.xlu0 %989, %v699
  %v991 = vpop.permute.xlu0 %990
  %994 = vset.pattern.permute.xlu0 0
  %995 = vperm.xlu0 %994, %v702
  %v996 = vpop.permute.xlu0 %995
  %999 = vset.pattern.permute.xlu0 0
  %1000 = vperm.xlu0 %999, %v705
  %v1001 = vpop.permute.xlu0 %1000
  %v1003 = vmul.f32 %v891, %v966
  %v1004 = vmul.f32 %v892, %v971
  %v1005 = vmul.f32 %v893, %v976
  %v1006 = vmul.f32 %v894, %v981
  %v1007 = vmul.f32 %v895, %v986
  %v1008 = vmul.f32 %v896, %v991
  %v1009 = vmul.f32 %v897, %v996
  %v1010 = vmul.f32 %v898, %v1001
  %1011 = vset.pattern.permute.xlu0 1
  %1012 = vperm.xlu0 %1011, %v684
  %v1013 = vpop.permute.xlu0 %1012
  %1015 = vset.pattern.permute.xlu0 1
  %1016 = vperm.xlu0 %1015, %v687
  %v1017 = vpop.permute.xlu0 %1016
  %1019 = vset.pattern.permute.xlu0 1
  %1020 = vperm.xlu0 %1019, %v690
  %v1021 = vpop.permute.xlu0 %1020
  %1023 = vset.pattern.permute.xlu0 1
  %1024 = vperm.xlu0 %1023, %v693
  %v1025 = vpop.permute.xlu0 %1024
  %1027 = vset.pattern.permute.xlu0 1
  %1028 = vperm.xlu0 %1027, %v696
  %v1029 = vpop.permute.xlu0 %1028
  %1031 = vset.pattern.permute.xlu0 1
  %1032 = vperm.xlu0 %1031, %v699
  %v1033 = vpop.permute.xlu0 %1032
  %1035 = vset.pattern.permute.xlu0 1
  %1036 = vperm.xlu0 %1035, %v702
  %v1037 = vpop.permute.xlu0 %1036
  %1039 = vset.pattern.permute.xlu0 1
  %1040 = vperm.xlu0 %1039, %v705
  %v1041 = vpop.permute.xlu0 %1040
  %v1043 = vmul.f32 %v891, %v1013
  %v1044 = vmul.f32 %v892, %v1017
  %v1045 = vmul.f32 %v893, %v1021
  %v1046 = vmul.f32 %v894, %v1025
  %v1047 = vmul.f32 %v895, %v1029
  %v1048 = vmul.f32 %v896, %v1033
  %v1049 = vmul.f32 %v897, %v1037
  %v1050 = vmul.f32 %v898, %v1041
  %v1051 = vmul.f32 %v922, 0.0
  %v1052 = vadd.f32 %v1051, %v1003
  %1054 = vset.pattern.permute.xlu0 0
  %1055 = vperm.xlu0 %1054, %v729
  %v1056 = vpop.permute.xlu0 %1055
  %v1058 = vmul.f32 %v1052, %v1056
  %v1059 = vadd.f32 %v903, %v1058
  %v1060 = vmul.f32 %v948, 0.0
  %v1061 = vadd.f32 %v1060, %v1043
  %1062 = vset.pattern.permute.xlu0 1
  %1063 = vperm.xlu0 %1062, %v729
  %v1064 = vpop.permute.xlu0 %1063
  %v1066 = vmul.f32 %v1061, %v1064
  %v1067 = vadd.f32 %v1059, %v1066
  %1068 = vst.msk [vmem:[#allocation2] sm:$0xff] %vm66, %v1067
  %v1069 = vmul.f32 %v924, %v1052
  %v1070 = vadd.f32 %v1069, %v1004
  %1072 = vset.pattern.permute.xlu0 0
  %1073 = vperm.xlu0 %1072, %v732
  %v1074 = vpop.permute.xlu0 %1073
  %v1076 = vmul.f32 %v1070, %v1074
  %v1077 = vadd.f32 %v904, %v1076
  %v1078 = vmul.f32 %v950, %v1061
  %v1079 = vadd.f32 %v1078, %v1044
  %1080 = vset.pattern.permute.xlu0 1
  %1081 = vperm.xlu0 %1080, %v732
  %v1082 = vpop.permute.xlu0 %1081
  %v1084 = vmul.f32 %v1079, %v1082
  %v1085 = vadd.f32 %v1077, %v1084
  %1086 = vst.msk [vmem:[#allocation2 + $0x8] sm:$0xff] %vm66, %v1085
  %v1087 = vmul.f32 %v926, %v1070
  %v1088 = vadd.f32 %v1087, %v1005
  %1090 = vset.pattern.permute.xlu0 0
  %1091 = vperm.xlu0 %1090, %v735
  %v1092 = vpop.permute.xlu0 %1091
  %v1094 = vmul.f32 %v1088, %v1092
  %v1095 = vadd.f32 %v905, %v1094
  %v1096 = vmul.f32 %v952, %v1079
  %v1097 = vadd.f32 %v1096, %v1045
  %1098 = vset.pattern.permute.xlu0 1
  %1099 = vperm.xlu0 %1098, %v735
  %v1100 = vpop.permute.xlu0 %1099
  %v1102 = vmul.f32 %v1097, %v1100
  %v1103 = vadd.f32 %v1095, %v1102
  %1104 = vst.msk [vmem:[#allocation2 + $0x10] sm:$0xff] %vm66, %v1103
  %v1105 = vmul.f32 %v928, %v1088
  %v1106 = vadd.f32 %v1105, %v1006
  %1108 = vset.pattern.permute.xlu0 0
  %1109 = vperm.xlu0 %1108, %v738
  %v1110 = vpop.permute.xlu0 %1109
  %v1112 = vmul.f32 %v1106, %v1110
  %v1113 = vadd.f32 %v906, %v1112
  %v1114 = vmul.f32 %v954, %v1097
  %v1115 = vadd.f32 %v1114, %v1046
  %1116 = vset.pattern.permute.xlu0 1
  %1117 = vperm.xlu0 %1116, %v738
  %v1118 = vpop.permute.xlu0 %1117
  %v1120 = vmul.f32 %v1115, %v1118
  %v1121 = vadd.f32 %v1113, %v1120
  %1122 = vst.msk [vmem:[#allocation2 + $0x18] sm:$0xff] %vm66, %v1121
  %v1123 = vmul.f32 %v930, %v1106
  %v1124 = vadd.f32 %v1123, %v1007
  %1126 = vset.pattern.permute.xlu0 0
  %1127 = vperm.xlu0 %1126, %v741
  %v1128 = vpop.permute.xlu0 %1127
  %v1130 = vmul.f32 %v1124, %v1128
  %v1131 = vadd.f32 %v907, %v1130
  %v1132 = vmul.f32 %v956, %v1115
  %v1133 = vadd.f32 %v1132, %v1047
  %1134 = vset.pattern.permute.xlu0 1
  %1135 = vperm.xlu0 %1134, %v741
  %v1136 = vpop.permute.xlu0 %1135
  %v1138 = vmul.f32 %v1133, %v1136
  %v1139 = vadd.f32 %v1131, %v1138
  %1140 = vst.msk [vmem:[#allocation2 + $0x20] sm:$0xff] %vm66, %v1139
  %v1141 = vmul.f32 %v932, %v1124
  %v1142 = vadd.f32 %v1141, %v1008
  %1144 = vset.pattern.permute.xlu0 0
  %1145 = vperm.xlu0 %1144, %v744
  %v1146 = vpop.permute.xlu0 %1145
  %v1148 = vmul.f32 %v1142, %v1146
  %v1149 = vadd.f32 %v908, %v1148
  %v1150 = vmul.f32 %v958, %v1133
  %v1151 = vadd.f32 %v1150, %v1048
  %1152 = vset.pattern.permute.xlu0 1
  %1153 = vperm.xlu0 %1152, %v744
  %v1154 = vpop.permute.xlu0 %1153
  %v1156 = vmul.f32 %v1151, %v1154
  %v1157 = vadd.f32 %v1149, %v1156
  %1158 = vst.msk [vmem:[#allocation2 + $0x28] sm:$0xff] %vm66, %v1157
  %v1159 = vmul.f32 %v934, %v1142
  %v1160 = vadd.f32 %v1159, %v1009
  %1162 = vset.pattern.permute.xlu0 0
  %1163 = vperm.xlu0 %1162, %v747
  %v1164 = vpop.permute.xlu0 %1163
  %v1166 = vmul.f32 %v1160, %v1164
  %v1167 = vadd.f32 %v909, %v1166
  %v1168 = vmul.f32 %v960, %v1151
  %v1169 = vadd.f32 %v1168, %v1049
  %1170 = vset.pattern.permute.xlu0 1
  %1171 = vperm.xlu0 %1170, %v747
  %v1172 = vpop.permute.xlu0 %1171
  %v1174 = vmul.f32 %v1169, %v1172
  %v1175 = vadd.f32 %v1167, %v1174
  %1176 = vst.msk [vmem:[#allocation2 + $0x30] sm:$0xff] %vm66, %v1175
  %v1177 = vmul.f32 %v936, %v1160
  %v1178 = vadd.f32 %v1177, %v1010
  %1180 = vset.pattern.permute.xlu0 0
  %1181 = vperm.xlu0 %1180, %v750
  %v1182 = vpop.permute.xlu0 %1181
  %v1184 = vmul.f32 %v1178, %v1182
  %v1185 = vadd.f32 %v910, %v1184
  %v1186 = vmul.f32 %v962, %v1169
  %v1187 = vadd.f32 %v1186, %v1050
  %1188 = vset.pattern.permute.xlu0 1
  %1189 = vperm.xlu0 %1188, %v750
  %v1190 = vpop.permute.xlu0 %1189
  %v1192 = vmul.f32 %v1187, %v1190
  %v1193 = vadd.f32 %v1185, %v1192
  %1194 = vst.msk [vmem:[#allocation2 + $0x38] sm:$0xff] %vm66, %v1193
  %v1195 = vld [vmem:[#allocation2] sm:$0xff]
  %v1196 = vld [vmem:[#allocation2 + $0x8] sm:$0xff]
  %v1197 = vld [vmem:[#allocation2 + $0x10] sm:$0xff]
  %v1198 = vld [vmem:[#allocation2 + $0x18] sm:$0xff]
  %v1199 = vld [vmem:[#allocation2 + $0x20] sm:$0xff]
  %v1200 = vld [vmem:[#allocation2 + $0x28] sm:$0xff]
  %v1201 = vld [vmem:[#allocation2 + $0x30] sm:$0xff]
  %v1202 = vld [vmem:[#allocation2 + $0x38] sm:$0xff]
  %v1203 = vand.u32 2147483647, %v305
  %v1204 = vand.u32 2147483647, %v308
  %v1205 = vand.u32 2147483647, %v311
  %v1206 = vand.u32 2147483647, %v314
  %v1207 = vand.u32 2147483647, %v317
  %v1208 = vand.u32 2147483647, %v320
  %v1209 = vand.u32 2147483647, %v323
  %v1210 = vand.u32 2147483647, %v326
  %v1211 = vsub.f32 0.0, %v1203
  %v1212 = vsub.f32 0.0, %v1204
  %v1213 = vsub.f32 0.0, %v1205
  %v1214 = vsub.f32 0.0, %v1206
  %v1215 = vsub.f32 0.0, %v1207
  %v1216 = vsub.f32 0.0, %v1208
  %v1217 = vsub.f32 0.0, %v1209
  %v1218 = vsub.f32 0.0, %v1210
  %v1219 = vmul.f32 %v1211, 1.442695
  %v1220 = vpow.pop %v1219
  %v1221 = vmul.f32 %v1212, 1.442695
  %v1222 = vpow.pop %v1221
  %v1223 = vmul.f32 %v1213, 1.442695
  %v1224 = vpow.pop %v1223
  %v1225 = vmul.f32 %v1214, 1.442695
  %v1226 = vpow.pop %v1225
  %v1227 = vmul.f32 %v1215, 1.442695
  %v1228 = vpow.pop %v1227
  %v1229 = vmul.f32 %v1216, 1.442695
  %v1230 = vpow.pop %v1229
  %v1231 = vmul.f32 %v1217, 1.442695
  %v1232 = vpow.pop %v1231
  %v1233 = vmul.f32 %v1218, 1.442695
  %v1234 = vpow.pop %v1233
  %vm1235 = vcmp.ge.f32.partialorder %v305, 0.0
  %vm1236 = vcmp.ge.f32.partialorder %v308, 0.0
  %vm1237 = vcmp.ge.f32.partialorder %v311, 0.0
  %vm1238 = vcmp.ge.f32.partialorder %v314, 0.0
  %vm1239 = vcmp.ge.f32.partialorder %v317, 0.0
  %vm1240 = vcmp.ge.f32.partialorder %v320, 0.0
  %vm1241 = vcmp.ge.f32.partialorder %v323, 0.0
  %vm1242 = vcmp.ge.f32.partialorder %v326, 0.0
  %v1243 = vadd.f32 %v1220, 1.0
  %v1244 = vadd.f32 %v1222, 1.0
  %v1245 = vadd.f32 %v1224, 1.0
  %v1246 = vadd.f32 %v1226, 1.0
  %v1247 = vadd.f32 %v1228, 1.0
  %v1248 = vadd.f32 %v1230, 1.0
  %v1249 = vadd.f32 %v1232, 1.0
  %v1250 = vadd.f32 %v1234, 1.0
  %v1251 = vrcp.pop %v1243
  %v1252 = vmul.f32 %v1243, %v1251
  %v1253 = vsub.f32 1.0, %v1252
  %v1254 = vmul.f32 %v1251, %v1253
  %v1255 = vadd.f32 %v1251, %v1254
  %vm1256 = vweird.f32 %v1243
  %vm1257 = vweird.f32 %v1251
  %vm1258 = vmor %vm1256, %vm1257
  %v1259 = vsel %vm1258, %v1251, %v1255
  %v1260 = vand.u32 2147483647, %v1243
  %vm1261 = vcmp.eq.f32.partialorder %v1260, 8.507059e+37
  %v1262 = vand.u32 %v1243, 2147483648
  %v1263 = vor.u32 1.1754944e-38, %v1262
  %v1264 = vsel %vm1261, %v1263, %v1259
  %v1265 = vmul.f32 1.0, %v1264
  %v1266 = vrcp.pop %v1244
  %v1267 = vmul.f32 %v1244, %v1266
  %v1268 = vsub.f32 1.0, %v1267
  %v1269 = vmul.f32 %v1266, %v1268
  %v1270 = vadd.f32 %v1266, %v1269
  %vm1271 = vweird.f32 %v1244
  %vm1272 = vweird.f32 %v1266
  %vm1273 = vmor %vm1271, %vm1272
  %v1274 = vsel %vm1273, %v1266, %v1270
  %v1275 = vand.u32 2147483647, %v1244
  %vm1276 = vcmp.eq.f32.partialorder %v1275, 8.507059e+37
  %v1277 = vand.u32 %v1244, 2147483648
  %v1278 = vor.u32 1.1754944e-38, %v1277
  %v1279 = vsel %vm1276, %v1278, %v1274
  %v1280 = vmul.f32 1.0, %v1279
  %v1281 = vrcp.pop %v1245
  %v1282 = vmul.f32 %v1245, %v1281
  %v1283 = vsub.f32 1.0, %v1282
  %v1284 = vmul.f32 %v1281, %v1283
  %v1285 = vadd.f32 %v1281, %v1284
  %vm1286 = vweird.f32 %v1245
  %vm1287 = vweird.f32 %v1281
  %vm1288 = vmor %vm1286, %vm1287
  %v1289 = vsel %vm1288, %v1281, %v1285
  %v1290 = vand.u32 2147483647, %v1245
  %vm1291 = vcmp.eq.f32.partialorder %v1290, 8.507059e+37
  %v1292 = vand.u32 %v1245, 2147483648
  %v1293 = vor.u32 1.1754944e-38, %v1292
  %v1294 = vsel %vm1291, %v1293, %v1289
  %v1295 = vmul.f32 1.0, %v1294
  %v1296 = vrcp.pop %v1246
  %v1297 = vmul.f32 %v1246, %v1296
  %v1298 = vsub.f32 1.0, %v1297
  %v1299 = vmul.f32 %v1296, %v1298
  %v1300 = vadd.f32 %v1296, %v1299
  %vm1301 = vweird.f32 %v1246
  %vm1302 = vweird.f32 %v1296
  %vm1303 = vmor %vm1301, %vm1302
  %v1304 = vsel %vm1303, %v1296, %v1300
  %v1305 = vand.u32 2147483647, %v1246
  %vm1306 = vcmp.eq.f32.partialorder %v1305, 8.507059e+37
  %v1307 = vand.u32 %v1246, 2147483648
  %v1308 = vor.u32 1.1754944e-38, %v1307
  %v1309 = vsel %vm1306, %v1308, %v1304
  %v1310 = vmul.f32 1.0, %v1309
  %v1311 = vrcp.pop %v1247
  %v1312 = vmul.f32 %v1247, %v1311
  %v1313 = vsub.f32 1.0, %v1312
  %v1314 = vmul.f32 %v1311, %v1313
  %v1315 = vadd.f32 %v1311, %v1314
  %vm1316 = vweird.f32 %v1247
  %vm1317 = vweird.f32 %v1311
  %vm1318 = vmor %vm1316, %vm1317
  %v1319 = vsel %vm1318, %v1311, %v1315
  %v1320 = vand.u32 2147483647, %v1247
  %vm1321 = vcmp.eq.f32.partialorder %v1320, 8.507059e+37
  %v1322 = vand.u32 %v1247, 2147483648
  %v1323 = vor.u32 1.1754944e-38, %v1322
  %v1324 = vsel %vm1321, %v1323, %v1319
  %v1325 = vmul.f32 1.0, %v1324
  %v1326 = vrcp.pop %v1248
  %v1327 = vmul.f32 %v1248, %v1326
  %v1328 = vsub.f32 1.0, %v1327
  %v1329 = vmul.f32 %v1326, %v1328
  %v1330 = vadd.f32 %v1326, %v1329
  %vm1331 = vweird.f32 %v1248
  %vm1332 = vweird.f32 %v1326
  %vm1333 = vmor %vm1331, %vm1332
  %v1334 = vsel %vm1333, %v1326, %v1330
  %v1335 = vand.u32 2147483647, %v1248
  %vm1336 = vcmp.eq.f32.partialorder %v1335, 8.507059e+37
  %v1337 = vand.u32 %v1248, 2147483648
  %v1338 = vor.u32 1.1754944e-38, %v1337
  %v1339 = vsel %vm1336, %v1338, %v1334
  %v1340 = vmul.f32 1.0, %v1339
  %v1341 = vrcp.pop %v1249
  %v1342 = vmul.f32 %v1249, %v1341
  %v1343 = vsub.f32 1.0, %v1342
  %v1344 = vmul.f32 %v1341, %v1343
  %v1345 = vadd.f32 %v1341, %v1344
  %vm1346 = vweird.f32 %v1249
  %vm1347 = vweird.f32 %v1341
  %vm1348 = vmor %vm1346, %vm1347
  %v1349 = vsel %vm1348, %v1341, %v1345
  %v1350 = vand.u32 2147483647, %v1249
  %vm1351 = vcmp.eq.f32.partialorder %v1350, 8.507059e+37
  %v1352 = vand.u32 %v1249, 2147483648
  %v1353 = vor.u32 1.1754944e-38, %v1352
  %v1354 = vsel %vm1351, %v1353, %v1349
  %v1355 = vmul.f32 1.0, %v1354
  %v1356 = vrcp.pop %v1250
  %v1357 = vmul.f32 %v1250, %v1356
  %v1358 = vsub.f32 1.0, %v1357
  %v1359 = vmul.f32 %v1356, %v1358
  %v1360 = vadd.f32 %v1356, %v1359
  %vm1361 = vweird.f32 %v1250
  %vm1362 = vweird.f32 %v1356
  %vm1363 = vmor %vm1361, %vm1362
  %v1364 = vsel %vm1363, %v1356, %v1360
  %v1365 = vand.u32 2147483647, %v1250
  %vm1366 = vcmp.eq.f32.partialorder %v1365, 8.507059e+37
  %v1367 = vand.u32 %v1250, 2147483648
  %v1368 = vor.u32 1.1754944e-38, %v1367
  %v1369 = vsel %vm1366, %v1368, %v1364
  %v1370 = vmul.f32 1.0, %v1369
  %v1371 = vmul.f32 %v1220, %v1264
  %v1372 = vmul.f32 %v1222, %v1279
  %v1373 = vmul.f32 %v1224, %v1294
  %v1374 = vmul.f32 %v1226, %v1309
  %v1375 = vmul.f32 %v1228, %v1324
  %v1376 = vmul.f32 %v1230, %v1339
  %v1377 = vmul.f32 %v1232, %v1354
  %v1378 = vmul.f32 %v1234, %v1369
  %v1379 = vsel %vm1235, %v1265, %v1371
  %v1380 = vsel %vm1236, %v1280, %v1372
  %v1381 = vsel %vm1237, %v1295, %v1373
  %v1382 = vsel %vm1238, %v1310, %v1374
  %v1383 = vsel %vm1239, %v1325, %v1375
  %v1384 = vsel %vm1240, %v1340, %v1376
  %v1385 = vsel %vm1241, %v1355, %v1377
  %v1386 = vsel %vm1242, %v1370, %v1378
  %v1387 = vmul.f32 %v305, %v1379
  %v1388 = vmul.f32 %v308, %v1380
  %v1389 = vmul.f32 %v311, %v1381
  %v1390 = vmul.f32 %v314, %v1382
  %v1391 = vmul.f32 %v317, %v1383
  %v1392 = vmul.f32 %v320, %v1384
  %v1393 = vmul.f32 %v323, %v1385
  %v1394 = vmul.f32 %v326, %v1386
  %v1395 = vmul.f32 %v1195, %v1387
  %v1396 = vmul.f32 %v1196, %v1388
  %v1397 = vmul.f32 %v1197, %v1389
  %v1398 = vmul.f32 %v1198, %v1390
  %v1399 = vmul.f32 %v1199, %v1391
  %v1400 = vmul.f32 %v1200, %v1392
  %v1401 = vmul.f32 %v1201, %v1393
  %v1402 = vmul.f32 %v1202, %v1394
  %v1403 = vld [vmem:[%s14] sm:$0xff]
  %v1404 = vld [vmem:[%s14 + $0x8] sm:$0xff]
  %v1405 = vld [vmem:[%s14 + $0x10] sm:$0xff]
  %v1406 = vld [vmem:[%s14 + $0x18] sm:$0xff]
  %v1407 = vld [vmem:[%s1] sm:$0xff]
  %v1408 = vld [vmem:[%s1 + $0x8] sm:$0xff]
  %v1409 = vld [vmem:[%s1 + $0x10] sm:$0xff]
  %v1410 = vld [vmem:[%s1 + $0x18] sm:$0xff]
  %v1411 = vld [vmem:[%s1 + $0x20] sm:$0xff]
  %v1412 = vld [vmem:[%s1 + $0x28] sm:$0xff]
  %v1413 = vld [vmem:[%s1 + $0x30] sm:$0xff]
  %v1414 = vld [vmem:[%s1 + $0x38] sm:$0xff]
  %v1415 = vmul.f32 %v1407, %v1407
  %v1416 = vmul.f32 %v1408, %v1408
  %v1417 = vmul.f32 %v1409, %v1409
  %v1418 = vmul.f32 %v1410, %v1410
  %v1419 = vmul.f32 %v1411, %v1411
  %v1420 = vmul.f32 %v1412, %v1412
  %v1421 = vmul.f32 %v1413, %v1413
  %v1422 = vmul.f32 %v1414, %v1414
  %v1423 = vsel %vm66, %v1415, 0.0
  %1424 = vadd.xlane.f32.xlu0 %v1423
  %v1425 = vpop.xlane.xlu0 %1424
  %v1426 = vsel %vm66, %v1416, 0.0
  %1427 = vadd.xlane.f32.xlu0 %v1426
  %v1428 = vpop.xlane.xlu0 %1427
  %v1429 = vsel %vm66, %v1417, 0.0
  %1430 = vadd.xlane.f32.xlu0 %v1429
  %v1431 = vpop.xlane.xlu0 %1430
  %v1432 = vsel %vm66, %v1418, 0.0
  %1433 = vadd.xlane.f32.xlu0 %v1432
  %v1434 = vpop.xlane.xlu0 %1433
  %v1435 = vsel %vm66, %v1419, 0.0
  %1436 = vadd.xlane.f32.xlu0 %v1435
  %v1437 = vpop.xlane.xlu0 %1436
  %v1438 = vsel %vm66, %v1420, 0.0
  %1439 = vadd.xlane.f32.xlu0 %v1438
  %v1440 = vpop.xlane.xlu0 %1439
  %v1441 = vsel %vm66, %v1421, 0.0
  %1442 = vadd.xlane.f32.xlu0 %v1441
  %v1443 = vpop.xlane.xlu0 %1442
  %v1444 = vsel %vm66, %v1422, 0.0
  %1445 = vadd.xlane.f32.xlu0 %v1444
  %v1446 = vpop.xlane.xlu0 %1445
  %v1447 = vmul.f32 %v1425, %v97
  %v1448 = vmul.f32 %v1428, %v97
  %v1449 = vmul.f32 %v1431, %v97
  %v1450 = vmul.f32 %v1434, %v97
  %v1451 = vmul.f32 %v1437, %v97
  %v1452 = vmul.f32 %v1440, %v97
  %v1453 = vmul.f32 %v1443, %v97
  %v1454 = vmul.f32 %v1446, %v97
  %v1455 = vadd.f32 %v1447, 1e-05
  %v1456 = vadd.f32 %v1448, 1e-05
  %v1457 = vadd.f32 %v1449, 1e-05
  %v1458 = vadd.f32 %v1450, 1e-05
  %v1459 = vadd.f32 %v1451, 1e-05
  %v1460 = vadd.f32 %v1452, 1e-05
  %v1461 = vadd.f32 %v1453, 1e-05
  %v1462 = vadd.f32 %v1454, 1e-05
  %v1463 = vrsqrt.pop %v1455
  %v1464 = vmul.f32 %v1463, %v1455
  %v1465 = vmul.f32 %v1464, %v1463
  %v1466 = vmul.f32 0.5, %v1465
  %v1467 = vsub.f32 1.5, %v1466
  %v1468 = vmul.f32 %v1463, %v1467
  %vm1469 = vweird.f32 %v1455
  %vm1470 = vweird.f32 %v1463
  %vm1471 = vmor %vm1469, %vm1470
  %v1472 = vsel %vm1471, %v1463, %v1468
  %v1473 = vrsqrt.pop %v1456
  %v1474 = vmul.f32 %v1473, %v1456
  %v1475 = vmul.f32 %v1474, %v1473
  %v1476 = vmul.f32 0.5, %v1475
  %v1477 = vsub.f32 1.5, %v1476
  %v1478 = vmul.f32 %v1473, %v1477
  %vm1479 = vweird.f32 %v1456
  %vm1480 = vweird.f32 %v1473
  %vm1481 = vmor %vm1479, %vm1480
  %v1482 = vsel %vm1481, %v1473, %v1478
  %v1483 = vrsqrt.pop %v1457
  %v1484 = vmul.f32 %v1483, %v1457
  %v1485 = vmul.f32 %v1484, %v1483
  %v1486 = vmul.f32 0.5, %v1485
  %v1487 = vsub.f32 1.5, %v1486
  %v1488 = vmul.f32 %v1483, %v1487
  %vm1489 = vweird.f32 %v1457
  %vm1490 = vweird.f32 %v1483
  %vm1491 = vmor %vm1489, %vm1490
  %v1492 = vsel %vm1491, %v1483, %v1488
  %v1493 = vrsqrt.pop %v1458
  %v1494 = vmul.f32 %v1493, %v1458
  %v1495 = vmul.f32 %v1494, %v1493
  %v1496 = vmul.f32 0.5, %v1495
  %v1497 = vsub.f32 1.5, %v1496
  %v1498 = vmul.f32 %v1493, %v1497
  %vm1499 = vweird.f32 %v1458
  %vm1500 = vweird.f32 %v1493
  %vm1501 = vmor %vm1499, %vm1500
  %v1502 = vsel %vm1501, %v1493, %v1498
  %v1503 = vrsqrt.pop %v1459
  %v1504 = vmul.f32 %v1503, %v1459
  %v1505 = vmul.f32 %v1504, %v1503
  %v1506 = vmul.f32 0.5, %v1505
  %v1507 = vsub.f32 1.5, %v1506
  %v1508 = vmul.f32 %v1503, %v1507
  %vm1509 = vweird.f32 %v1459
  %vm1510 = vweird.f32 %v1503
  %vm1511 = vmor %vm1509, %vm1510
  %v1512 = vsel %vm1511, %v1503, %v1508
  %v1513 = vrsqrt.pop %v1460
  %v1514 = vmul.f32 %v1513, %v1460
  %v1515 = vmul.f32 %v1514, %v1513
  %v1516 = vmul.f32 0.5, %v1515
  %v1517 = vsub.f32 1.5, %v1516
  %v1518 = vmul.f32 %v1513, %v1517
  %vm1519 = vweird.f32 %v1460
  %vm1520 = vweird.f32 %v1513
  %vm1521 = vmor %vm1519, %vm1520
  %v1522 = vsel %vm1521, %v1513, %v1518
  %v1523 = vrsqrt.pop %v1461
  %v1524 = vmul.f32 %v1523, %v1461
  %v1525 = vmul.f32 %v1524, %v1523
  %v1526 = vmul.f32 0.5, %v1525
  %v1527 = vsub.f32 1.5, %v1526
  %v1528 = vmul.f32 %v1523, %v1527
  %vm1529 = vweird.f32 %v1461
  %vm1530 = vweird.f32 %v1523
  %vm1531 = vmor %vm1529, %vm1530
  %v1532 = vsel %vm1531, %v1523, %v1528
  %v1533 = vrsqrt.pop %v1462
  %v1534 = vmul.f32 %v1533, %v1462
  %v1535 = vmul.f32 %v1534, %v1533
  %v1536 = vmul.f32 0.5, %v1535
  %v1537 = vsub.f32 1.5, %v1536
  %v1538 = vmul.f32 %v1533, %v1537
  %vm1539 = vweird.f32 %v1462
  %vm1540 = vweird.f32 %v1533
  %vm1541 = vmor %vm1539, %vm1540
  %v1542 = vsel %vm1541, %v1533, %v1538
  %v1543 = vmul.f32 %v1407, %v1472
  %v1544 = vmul.f32 %v1408, %v1482
  %v1545 = vmul.f32 %v1409, %v1492
  %v1546 = vmul.f32 %v1410, %v1502
  %v1547 = vmul.f32 %v1411, %v1512
  %v1548 = vmul.f32 %v1412, %v1522
  %v1549 = vmul.f32 %v1413, %v1532
  %v1550 = vmul.f32 %v1414, %v1542
  %v1551 = vld [vmem:[%s2] sm:$0x1]
  %v1553 = vperm.slane %v1551, 0
  %v1555 = vmul.f32 %v1543, %v1553
  %v1556 = vmul.f32 %v1544, %v1553
  %v1557 = vmul.f32 %v1545, %v1553
  %v1558 = vmul.f32 %v1546, %v1553
  %v1559 = vmul.f32 %v1547, %v1553
  %v1560 = vmul.f32 %v1548, %v1553
  %v1561 = vmul.f32 %v1549, %v1553
  %v1562 = vmul.f32 %v1550, %v1553
  %v1564 = vsel %vm66, %v1395, 0
  %v1567 = vsel %vm66, %v1396, 0
  %v1570 = vsel %vm66, %v1397, 0
  %v1573 = vsel %vm66, %v1398, 0
  %v1576 = vsel %vm66, %v1399, 0
  %v1579 = vsel %vm66, %v1400, 0
  %v1582 = vsel %vm66, %v1401, 0
  %v1585 = vsel %vm66, %v1402, 0
  %1587 = vmatpush.msra.mxu0 0.0
  %1588 = vmatpush.msra.mxu0 0.0
  %1589 = vmatpush.msra.mxu0 0.0
  %1590 = vmatpush.msra.mxu0 0.0
  %1591 = vmatpush.msra.mxu0 0.0
  %1592 = vmatpush.msra.mxu0 0.0
  %1593 = vmatpush.msra.mxu0 0.0
  %1594 = vmatpush.msra.mxu0 0.0
  %1595 = vmatpush.msra.mxu0 0.0
  %1596 = vmatpush.msra.mxu0 0.0
  %1597 = vmatpush.msra.mxu0 0.0
  %1598 = vmatpush.msra.mxu0 0.0
  %1599 = vmatpush.msra.mxu0 %v1406
  %1600 = vmatpush.msra.mxu0 %v1405
  %1601 = vmatpush.msra.mxu0 %v1404
  %1602 = vmatpush.msra.mxu0 %v1403
  %1603 = vmatmul.f32.gmra.mxu0 %v1564
  %v1604 = vpop.f32.mrf.mxu0
  %v1605 = vadd.f32 %v1555, %v1604
  %1606 = vmatmul.f32.gmra.mxu0 %v1567
  %v1607 = vpop.f32.mrf.mxu0
  %v1608 = vadd.f32 %v1556, %v1607
  %1609 = vmatmul.f32.gmra.mxu0 %v1570
  %v1610 = vpop.f32.mrf.mxu0
  %v1611 = vadd.f32 %v1557, %v1610
  %1612 = vmatmul.f32.gmra.mxu0 %v1573
  %v1613 = vpop.f32.mrf.mxu0
  %v1614 = vadd.f32 %v1558, %v1613
  %1615 = vmatmul.f32.gmra.mxu0 %v1576
  %v1616 = vpop.f32.mrf.mxu0
  %v1617 = vadd.f32 %v1559, %v1616
  %1618 = vmatmul.f32.gmra.mxu0 %v1579
  %v1619 = vpop.f32.mrf.mxu0
  %v1620 = vadd.f32 %v1560, %v1619
  %1621 = vmatmul.f32.gmra.mxu0 %v1582
  %v1622 = vpop.f32.mrf.mxu0
  %v1623 = vadd.f32 %v1561, %v1622
  %1624 = vmatmul.f32.gmra.mxu0 %v1585
  %v1625 = vpop.f32.mrf.mxu0
  %v1626 = vadd.f32 %v1562, %v1625
  %1627 = vdwg.mxu0
  %1628 = vst.msk [vmem:[%s15] sm:$0xff] %vm66, %v1605
  %1629 = vst.msk [vmem:[%s15 + $0x8] sm:$0xff] %vm66, %v1608
  %1630 = vst.msk [vmem:[%s15 + $0x10] sm:$0xff] %vm66, %v1611
  %1631 = vst.msk [vmem:[%s15 + $0x18] sm:$0xff] %vm66, %v1614
  %1632 = vst.msk [vmem:[%s15 + $0x20] sm:$0xff] %vm66, %v1617
  %1633 = vst.msk [vmem:[%s15 + $0x28] sm:$0xff] %vm66, %v1620
  %1634 = vst.msk [vmem:[%s15 + $0x30] sm:$0xff] %vm66, %v1623
  %1635 = vst.msk [vmem:[%s15 + $0x38] sm:$0xff] %vm66, %v1626
  // Predicated region
  $region62: #{tpu_custom_call.1} parent=0 // pred_check
    _
  $region63: #{tpu_custom_call.1} parent=0 // pred_check_branch
    %1637 = sbr.rel (0) target = $region65
  $region64: #{tpu_custom_call.1} parent=0 // pred_region
    _
  $region65: #{tpu_custom_call.1} parent=0 // pred_fallthru
    _
  // Predicated region
  $region66: #{tpu_custom_call.1} parent=0 // pred_check
    _
  $region67: #{tpu_custom_call.1} parent=0 // pred_check_branch
    %1639 = sbr.rel (0) target = $region69
  $region68: #{tpu_custom_call.1} parent=0 // pred_region
    _
  $region69: #{tpu_custom_call.1} parent=0 // pred_fallthru
    _

</llo_original>
